<compile_context>
chip_gen: v6e
topology: v6e:2x2x1
jax: 0.10.0
libtpu: 0.0.40
codegen_flags: <defaults>
</compile_context>

<pallas_src>
import functools

import jax
import jax.numpy as jnp
from jax.experimental import pallas as pl
from jax.experimental.pallas import tpu as pltpu

EPS = 1e-5
LANE = 128


def _round_up(x, m):
    return (x + m - 1) // m * m


# ---------------------------------------------------------------------------
# In-kernel helpers
# ---------------------------------------------------------------------------
def _conv3_packed(z, wc_ref, we_ref, edges_ref, y_ref, stats_ref):
    """Fused k=3 Conv1d on the L-packed layout + per-tile sum / sum-of-squares.

    z:         (tn, Lp, GC) conv input for this tile (pre-activated), GC = G*Ce lanes
    wc_ref:    (GC, GC)     block-banded center weights (taps landing inside the group)
    we_ref:    (2*Ce, GC)   halo weights (previous group's last position, next group's first)
    edges_ref: VMEM scratch (tn, Lp, 2*Ce) holding the halo operand
    y_ref:     (tn, Lp, GC) conv output tile (stored in y_ref.dtype, e.g. bf16)
    stats_ref: (1, 2, GC)   f32 per-tile [sum, sumsq]
    """
    tn, lp, gc = z.shape
    ce = we_ref.shape[0] // 2
    cdt = wc_ref.dtype
    zc = z.astype(cdt)

    # Halo operand: [x(prev position, last Ce lanes) | x(next position, first Ce lanes)].
    # Boundary zero rows are written every grid step (NOT hoisted under pl.when(pid == 0)):
    # with "parallel" megacore splitting another core may never execute pid == 0 on its scratch.
    zero = jnp.zeros((tn, 1, ce), cdt)
    edges_ref[:, 0:1, 0:ce] = zero
    edges_ref[:, lp - 1:, ce:] = zero
    if lp > 1:
        edges_ref[:, 1:, 0:ce] = zc[:, : lp - 1, gc - ce:]
        edges_ref[:, : lp - 1, ce:] = zc[:, 1:, 0:ce]

    # Center taps: the big lane-dense MXU matmul; operand is the input tile itself (no copy).
    y = jnp.dot(zc.reshape(tn * lp, gc), wc_ref[...],
                preferred_element_type=jnp.float32)
    # Halo taps: small correction matmul for the cross-group neighbours.
    y = y + jnp.dot(edges_ref[...].reshape(tn * lp, 2 * ce), we_ref[...],
                    preferred_element_type=jnp.float32)

    # TODO(synk): on v7x, chunk this over ~512-row slabs (lax.fori_loop) so the stats accumulate
    # while each slab is stored, instead of re-reading the spilled f32 y three times.
    stats_ref[0, 0:1, :] = jnp.sum(y, axis=0, keepdims=True)
    stats_ref[0, 1:2, :] = jnp.sum(y * y, axis=0, keepdims=True)
    y_ref[...] = y.reshape(tn, lp, gc).astype(y_ref.dtype)


def conv_stats_kernel(x_ref, wc_ref, we_ref, y_ref, stats_ref, edges_ref):
    """Pass 1: conv1 + per-tile BN1 partial statistics."""
    _conv3_packed(x_ref[...], wc_ref, we_ref, edges_ref, y_ref, stats_ref)


def affine_relu_conv_stats_kernel(x_ref, scale_ref, shift_ref, wc_ref, we_ref,
                                  y_ref, stats_ref, edges_ref):
    """Pass 2: BN1-apply (folded per-channel affine) + ReLU + conv2 + per-tile BN2 partials."""
    z = jnp.maximum(x_ref[...].astype(jnp.float32) * scale_ref[...] + shift_ref[...], 0.0)
    _conv3_packed(z, wc_ref, we_ref, edges_ref, y_ref, stats_ref)


def bn_residual_relu_kernel(y_ref, x_ref, scale_ref, shift_ref, o_ref):
    """Pass 3: BN2-apply (folded affine) + identity residual + final ReLU."""
    out = (y_ref[...].astype(jnp.float32) * scale_ref[...] + shift_ref[...]
           + x_ref[...].astype(jnp.float32))
    o_ref[...] = jnp.maximum(out, 0.0).astype(o_ref.dtype)


# ---------------------------------------------------------------------------
# Wrapper-side helpers
# ---------------------------------------------------------------------------
def _pick_tile_n(n, rows_per_sample, target_rows):
    """Largest batch-tile that fits the row budget, preferring >= 2 grid steps so the v7x
    megacore can split the grid and BlockSpec double-buffering actually pipelines DMA."""
    divisors = [t for t in range(1, n + 1) if n % t == 0]
    multi = [t for t in divisors if n // t >= 2]
    pool = multi if multi else divisors
    fitting = [t for t in pool if t * rows_per_sample <= target_rows]
    return max(fitting) if fitting else min(pool)


def _pack_weights(w, ce, g, compute_dtype):
    """(Cout, Cin, 3) Conv1d weight -> (GC, GC) center weight + (2*Ce, GC) halo weight.

    out[p+j] = sum_k x[p+j+k-1] @ w[:,:,k].T ; the center matrix carries every tap whose input
    position lies inside the same packed group (block (i, j) = w[:,:,i-j+1].T for |i-j| <= 1),
    the halo matrix carries the previous group's last position (tap 0 -> output block 0) and the
    next group's first position (tap 2 -> output block G-1)."""
    c = w.shape[0]
    wt = jnp.zeros((3, ce, ce), jnp.float32)
    wt = wt.at[:, :c, :c].set(jnp.transpose(w.astype(jnp.float32), (2, 1, 0)))  # (3, Cin, Cout)
    gc = g * ce
    wc = jnp.zeros((gc, gc), jnp.float32)
    for i in range(g):
        for j in range(g):
            k = i - j + 1
            if 0 <= k <= 2:
                wc = wc.at[i * ce:(i + 1) * ce, j * ce:(j + 1) * ce].set(wt[k])
    we = jnp.zeros((2 * ce, gc), jnp.float32)
    we = we.at[0:ce, 0:ce].set(wt[0])
    we = we.at[ce:2 * ce, (g - 1) * ce:g * ce].set(wt[2])
    return wc.astype(compute_dtype), we.astype(compute_dtype)


def _bn_fold(partial_stats, gamma, beta, count, g, ce):
    """Fold training-mode BatchNorm1d (biased variance, eps=1e-5) into per-lane scale/shift.

    partial_stats: (n_tiles, 2, G*Ce) per-tile [sum, sumsq]; packed lane j*Ce+ch is channel ch.
    """
    tot = jnp.sum(partial_stats, axis=0).reshape(2, g, ce).sum(axis=1)   # (2, Ce) per channel
    mean = tot[0] / count
    # TODO(synk): one-pass E[y^2]-mean^2 can cancel for |mean| >> std; a mean-shifted / Welford
    # merge of the per-tile partials would be more robust for very large N*L.
    var = jnp.maximum(tot[1] / count - mean * mean, 0.0)
    inv = jax.lax.rsqrt(var + EPS)
    scale = gamma * inv
    shift = beta - mean * scale
    return jnp.tile(scale, g).reshape(1, g * ce), jnp.tile(shift, g).reshape(1, g * ce)


# ---------------------------------------------------------------------------
# Forward
# ---------------------------------------------------------------------------
@functools.partial(jax.jit, static_argnames=("compute_dtype", "out_dtype", "target_rows"))
def resblock_forward(x_ncl, w1, w2, g1, b1, g2, b2, *,
                     compute_dtype=jnp.bfloat16, out_dtype=jnp.float32, target_rows=2048):
    """x_ncl: (N, C, L) like PyTorch. w1/w2: (Cout, Cin, 3). g*/b*: (Cout,) BN affine params."""
    n, c_in, length = x_ncl.shape
    c_out = w1.shape[0]
    assert c_in == c_out, "identity shortcut requires inchannel == outchannel"
    # TODO(synk): user-supplied `shortcut` module / stride>1 downsample path not implemented.
    # TODO(synk): training-mode BN running_mean/running_var side-effect updates are not produced.

    # --- lane layout: pack G consecutive L positions into the 128-lane axis when possible ---
    if c_out <= LANE and LANE % c_out == 0 and length % (LANE // c_out) == 0:
        g, ce = LANE // c_out, c_out                # dense lanes, zero channel padding
    else:
        g, ce = 1, _round_up(c_out, LANE)           # fallback: pad channels to a lane multiple
    gc = g * ce
    lp = length // g

    tn = _pick_tile_n(n, lp, target_rows)
    n_tiles = n // tn
    count = n * length                               # BN statistics span the full (N, L) batch
    # TODO(synk): add L-tiling with one-position halos for very long sequences / tiny N.
    assert tn * lp * gc * 4 <= 8 * 1024 * 1024, "per-tile footprint too large (needs L-tiling)"

    # --- interface glue: PyTorch NCL -> packed channels-last, stored in compute_dtype ---
    # TODO(synk): in a full model keep activations packed channels-last end-to-end to drop this.
    x_cl = jnp.transpose(x_ncl, (0, 2, 1)).astype(jnp.float32)
    if g > 1:
        xp = x_cl.reshape(n, lp, gc)
    else:
        xp = jnp.pad(x_cl, ((0, 0), (0, 0), (0, ce - c_out)))
    xp = xp.astype(compute_dtype)

    w1c, w1e = _pack_weights(w1, ce, g, compute_dtype)
    w2c, w2e = _pack_weights(w2, ce, g, compute_dtype)
    pad_vec = lambda v: jnp.pad(v.astype(jnp.float32), (0, ce - c_out))
    g1p, b1p, g2p, b2p = map(pad_vec, (g1, b1, g2, b2))

    cparams = pltpu.CompilerParams(
        dimension_semantics=("parallel",),           # disjoint output tiles -> megacore-safe
        vmem_limit_bytes=32 * 1024 * 1024,           # <= physical VMEM on v5e/v6e/v7x
    )
    tile_spec = pl.BlockSpec((tn, lp, gc), lambda i: (i, 0, 0))      # dtype-agnostic
    wc_spec = pl.BlockSpec((gc, gc), lambda i: (0, 0))
    we_spec = pl.BlockSpec((2 * ce, gc), lambda i: (0, 0))
    vec_spec = pl.BlockSpec((1, gc), lambda i: (0, 0))
    stats_spec = pl.BlockSpec((1, 2, gc), lambda i: (i, 0, 0))
    edges_scratch = pltpu.VMEM((tn, lp, 2 * ce), compute_dtype)

    # --- pass 1: conv1 + per-tile BN1 partial stats (y1 stored in compute_dtype) ---
    y1, st1 = pl.pallas_call(
        conv_stats_kernel,
        out_shape=(jax.ShapeDtypeStruct((n, lp, gc), compute_dtype),
                   jax.ShapeDtypeStruct((n_tiles, 2, gc), jnp.float32)),
        grid=(n_tiles,),
        in_specs=[tile_spec, wc_spec, we_spec],
        out_specs=(tile_spec, stats_spec),
        scratch_shapes=[edges_scratch],
        compiler_params=cparams,
    )(xp, w1c, w1e)
    scale1, shift1 = _bn_fold(st1, g1p, b1p, count, g, ce)

    # --- pass 2: BN1-apply + ReLU + conv2 + per-tile BN2 partial stats ---
    y2, st2 = pl.pallas_call(
        affine_relu_conv_stats_kernel,
        out_shape=(jax.ShapeDtypeStruct((n, lp, gc), compute_dtype),
                   jax.ShapeDtypeStruct((n_tiles, 2, gc), jnp.float32)),
        grid=(n_tiles,),
        in_specs=[tile_spec, vec_spec, vec_spec, wc_spec, we_spec],
        out_specs=(tile_spec, stats_spec),
        scratch_shapes=[edges_scratch],
        compiler_params=cparams,
    )(y1, scale1, shift1, w2c, w2e)
    scale2, shift2 = _bn_fold(st2, g2p, b2p, count, g, ce)

    # --- pass 3: BN2-apply + identity residual + final ReLU ---
    out_p = pl.pallas_call(
        bn_residual_relu_kernel,
        out_shape=jax.ShapeDtypeStruct((n, lp, gc), out_dtype),
        grid=(n_tiles,),
        in_specs=[tile_spec, tile_spec, vec_spec, vec_spec],
        out_specs=tile_spec,
        compiler_params=cparams,
    )(y2, xp, scale2, shift2)

    # Interface glue back to PyTorch (N, C, L).
    out_cl = out_p.reshape(n, length, ce)[:, :, :c_out]
    return jnp.transpose(out_cl, (0, 2, 1))


# ---------------------------------------------------------------------------
# Pure-JAX reference (PyTorch semantics, NCL layout)
# ---------------------------------------------------------------------------
def ref_forward(x, w1, w2, g1, b1, g2, b2):
    def conv1d(y, w):  # y (N,C,L), w (Co,Ci,3), stride 1, pad 1, no bias
        n, ci, length = y.shape
        yp = jnp.pad(y, ((0, 0), (0, 0), (1, 1)))
        out = jnp.zeros((n, w.shape[0], length), jnp.float32)
        for k in range(3):
            out = out + jnp.einsum("ncl,oc->nol", yp[:, :, k:k + length], w[:, :, k])
        return out

    def bn(y, g, b):
        mean = y.mean(axis=(0, 2), keepdims=True)
        var = ((y - mean) ** 2).mean(axis=(0, 2), keepdims=True)
        return (y - mean) / jnp.sqrt(var + EPS) * g[None, :, None] + b[None, :, None]

    y = jax.nn.relu(bn(conv1d(x, w1), g1, b1))
    y = bn(conv1d(y, w2), g2, b2)
    return jax.nn.relu(y + x)


# ---------------------------------------------------------------------------
if __name__ == "__main__":
    # ResBlock(inchannel=32, outchannel=32, stride=1, shortcut=None)
    N, C, L = 2, 32, 16

    key = jax.random.PRNGKey(0)
    k_x, k_w1, k_w2 = jax.random.split(key, 3)

    x = jax.random.normal(k_x, (N, C, L), dtype=jnp.float32)          # PyTorch NCL input
    w1 = 0.2 * jax.random.normal(k_w1, (C, C, 3), dtype=jnp.float32)  # Conv1d(C, C, 3) weight
    w2 = 0.2 * jax.random.normal(k_w2, (C, C, 3), dtype=jnp.float32)
    g1 = jnp.ones((C,), jnp.float32)   # BatchNorm1d default init: weight=1, bias=0
    b1 = jnp.zeros((C,), jnp.float32)
    g2 = jnp.ones((C,), jnp.float32)
    b2 = jnp.zeros((C,), jnp.float32)

    ref = ref_forward(x, w1, w2, g1, b1, g2, b2)

    # f32 operands + f32 intermediates: exact-semantics check against the reference.
    out_f32 = jax.block_until_ready(
        resblock_forward(x, w1, w2, g1, b1, g2, b2, compute_dtype=jnp.float32))
    assert out_f32.shape == (N, C, L)
    assert jnp.allclose(out_f32, ref, atol=1e-4, rtol=1e-4), float(jnp.max(jnp.abs(out_f32 - ref)))

    # Default path: bf16 matmul operands AND bf16 inter-pass activations (f32 accumulation) --
    # the HBM-traffic / MXU-rate configuration for v5e/v6e/v7x.
    out_bf16 = jax.block_until_ready(resblock_forward(x, w1, w2, g1, b1, g2, b2))
    assert out_bf16.shape == (N, C, L)
    assert jnp.allclose(out_bf16, ref, atol=1.5e-1, rtol=1.5e-1), \
        float(jnp.max(jnp.abs(out_bf16 - ref)))

    print("KERNEL_OK")
</pallas_src>

<mosaic_0001>
module attributes {stable_mosaic.version = 11 : i64} {
  func.func @conv_stats_kernel(%arg0: i32, %arg1: memref<1x4x128xf32, #tpu.memory_space<vmem>>, %arg2: memref<128x128xf32, #tpu.memory_space<vmem>>, %arg3: memref<64x128xf32, #tpu.memory_space<vmem>>, %arg4: memref<1x4x128xf32, #tpu.memory_space<vmem>>, %arg5: memref<1x2x128xf32, #tpu.memory_space<vmem>>, %arg6: memref<1x4x64xf32, #tpu.memory_space<vmem>>) attributes {dimension_semantics = [#tpu.dimension_semantics<parallel>], iteration_bounds = array<i64: 2>, scalar_prefetch = 0 : i64, scratch_operands = 1 : i64, tpu.core_type = #tpu.core_type<tc>, window_params = [{transform_indices = @transform_0, window_bounds = array<i64: 1, 4, 128>}, {pipeline_mode = #tpu.pipeline_mode<synchronous>, transform_indices = @transform_1, window_bounds = array<i64: 128, 128>}, {pipeline_mode = #tpu.pipeline_mode<synchronous>, transform_indices = @transform_2, window_bounds = array<i64: 64, 128>}, {transform_indices = @transform_3, window_bounds = array<i64: 1, 4, 128>}, {transform_indices = @transform_4, window_bounds = array<i64: 1, 2, 128>}]} {
    %c0 = arith.constant 0 : index
    %c0_0 = arith.constant 0 : index
    %c0_1 = arith.constant 0 : index
    %0 = vector.load %arg1[%c0, %c0_0, %c0_1] : memref<1x4x128xf32, #tpu.memory_space<vmem>>, vector<1x4x128xf32>
    %cst = arith.constant 0.000000e+00 : f32
    %1 = vector.broadcast %cst : f32 to vector<1x1x32xf32>
    %c0_2 = arith.constant 0 : index
    %c0_3 = arith.constant 0 : index
    %c0_4 = arith.constant 0 : index
    %2 = vector.load %arg6[%c0_2, %c0_3, %c0_4] : memref<1x4x64xf32, #tpu.memory_space<vmem>>, vector<1x1x32xf32>
    tpu.vector_store %arg6[%c0_2, %c0_3, %c0_4], %1 {strides = array<i32>} : memref<1x4x64xf32, #tpu.memory_space<vmem>>, vector<1x1x32xf32>,
    %c0_5 = arith.constant 0 : index
    %c3 = arith.constant 3 : index
    %c32 = arith.constant 32 : index
    %3 = vector.load %arg6[%c0_5, %c3, %c32] : memref<1x4x64xf32, #tpu.memory_space<vmem>>, vector<1x1x32xf32>
    tpu.vector_store %arg6[%c0_5, %c3, %c32], %1 {strides = array<i32>} : memref<1x4x64xf32, #tpu.memory_space<vmem>>, vector<1x1x32xf32>,
    %4 = vector.extract_strided_slice %0 {offsets = [0, 0, 96], sizes = [1, 3, 32], strides = [1, 1, 1]} : vector<1x4x128xf32> to vector<1x3x32xf32>
    %c0_6 = arith.constant 0 : index
    %c1 = arith.constant 1 : index
    %c0_7 = arith.constant 0 : index
    %5 = vector.load %arg6[%c0_6, %c1, %c0_7] : memref<1x4x64xf32, #tpu.memory_space<vmem>>, vector<1x3x32xf32>
    tpu.vector_store %arg6[%c0_6, %c1, %c0_7], %4 {strides = array<i32>} : memref<1x4x64xf32, #tpu.memory_space<vmem>>, vector<1x3x32xf32>,
    %6 = vector.extract_strided_slice %0 {offsets = [0, 1, 0], sizes = [1, 3, 32], strides = [1, 1, 1]} : vector<1x4x128xf32> to vector<1x3x32xf32>
    %c0_8 = arith.constant 0 : index
    %c0_9 = arith.constant 0 : index
    %c32_10 = arith.constant 32 : index
    %7 = vector.load %arg6[%c0_8, %c0_9, %c32_10] : memref<1x4x64xf32, #tpu.memory_space<vmem>>, vector<1x3x32xf32>
    tpu.vector_store %arg6[%c0_8, %c0_9, %c32_10], %6 {strides = array<i32>} : memref<1x4x64xf32, #tpu.memory_space<vmem>>, vector<1x3x32xf32>,
    %8 = vector.shape_cast %0 : vector<1x4x128xf32> to vector<4x128xf32>
    %c0_11 = arith.constant 0 : index
    %c0_12 = arith.constant 0 : index
    %9 = vector.load %arg2[%c0_11, %c0_12] : memref<128x128xf32, #tpu.memory_space<vmem>>, vector<128x128xf32>
    %cst_13 = arith.constant dense<0.000000e+00> : vector<4x128xf32>
    %10 = tpu.matmul %8, %9, %cst_13 {dimension_numbers = #tpu.dot_dimension_numbers<[1], [0], [0], [1], [0, 0, 1, 1], [], []>} : vector<4x128xf32>, vector<128x128xf32>, vector<4x128xf32> -> vector<4x128xf32>
    %c0_14 = arith.constant 0 : index
    %c0_15 = arith.constant 0 : index
    %c0_16 = arith.constant 0 : index
    %11 = vector.load %arg6[%c0_14, %c0_15, %c0_16] : memref<1x4x64xf32, #tpu.memory_space<vmem>>, vector<1x4x64xf32>
    %12 = vector.shape_cast %11 : vector<1x4x64xf32> to vector<4x64xf32>
    %c0_17 = arith.constant 0 : index
    %c0_18 = arith.constant 0 : index
    %13 = vector.load %arg3[%c0_17, %c0_18] : memref<64x128xf32, #tpu.memory_space<vmem>>, vector<64x128xf32>
    %cst_19 = arith.constant dense<0.000000e+00> : vector<4x128xf32>
    %14 = tpu.matmul %12, %13, %cst_19 {dimension_numbers = #tpu.dot_dimension_numbers<[1], [0], [0], [1], [0, 0, 1, 1], [], []>} : vector<4x64xf32>, vector<64x128xf32>, vector<4x128xf32> -> vector<4x128xf32>
    %15 = arith.addf %10, %14 : vector<4x128xf32>
    %cst_20 = arith.constant dense<0.000000e+00> : vector<128xf32>
    %16 = vector.multi_reduction <add>, %15, %cst_20 [0] : vector<4x128xf32> to vector<128xf32>
    %17 = vector.shape_cast %16 : vector<128xf32> to vector<1x128xf32>
    %c0_21 = arith.constant 0 : index
    %c0_22 = arith.constant 0 : index
    %c0_23 = arith.constant 0 : index
    %18 = vector.load %arg5[%c0_21, %c0_22, %c0_23] : memref<1x2x128xf32, #tpu.memory_space<vmem>>, vector<1x1x128xf32>
    %19 = vector.shape_cast %18 : vector<1x1x128xf32> to vector<1x128xf32>
    %20 = vector.shape_cast %17 : vector<1x128xf32> to vector<1x1x128xf32>
    tpu.vector_store %arg5[%c0_21, %c0_22, %c0_23], %20 {strides = array<i32>} : memref<1x2x128xf32, #tpu.memory_space<vmem>>, vector<1x1x128xf32>,
    %21 = arith.mulf %15, %15 : vector<4x128xf32>
    %cst_24 = arith.constant dense<0.000000e+00> : vector<128xf32>
    %22 = vector.multi_reduction <add>, %21, %cst_24 [0] : vector<4x128xf32> to vector<128xf32>
    %23 = vector.shape_cast %22 : vector<128xf32> to vector<1x128xf32>
    %c0_25 = arith.constant 0 : index
    %c1_26 = arith.constant 1 : index
    %c0_27 = arith.constant 0 : index
    %24 = vector.load %arg5[%c0_25, %c1_26, %c0_27] : memref<1x2x128xf32, #tpu.memory_space<vmem>>, vector<1x1x128xf32>
    %25 = vector.shape_cast %24 : vector<1x1x128xf32> to vector<1x128xf32>
    %26 = vector.shape_cast %23 : vector<1x128xf32> to vector<1x1x128xf32>
    tpu.vector_store %arg5[%c0_25, %c1_26, %c0_27], %26 {strides = array<i32>} : memref<1x2x128xf32, #tpu.memory_space<vmem>>, vector<1x1x128xf32>,
    %27 = vector.shape_cast %15 : vector<4x128xf32> to vector<1x4x128xf32>
    %c0_28 = arith.constant 0 : index
    %c0_29 = arith.constant 0 : index
    %c0_30 = arith.constant 0 : index
    %28 = vector.load %arg4[%c0_28, %c0_29, %c0_30] : memref<1x4x128xf32, #tpu.memory_space<vmem>>, vector<1x4x128xf32>
    tpu.vector_store %arg4[%c0_28, %c0_29, %c0_30], %27 {strides = array<i32>} : memref<1x4x128xf32, #tpu.memory_space<vmem>>, vector<1x4x128xf32>,
    return
  }
  func.func @transform_0(%arg0: i32) -> (i32, i32, i32) {
    %c0_i32 = arith.constant 0 : i32
    %c0_i32_0 = arith.constant 0 : i32
    %c0_i32_1 = arith.constant 0 : i32
    return %arg0, %c0_i32, %c0_i32_0 : i32, i32, i32
  }
  func.func @transform_1(%arg0: i32) -> (i32, i32) {
    %c0_i32 = arith.constant 0 : i32
    %c0_i32_0 = arith.constant 0 : i32
    %c0_i32_1 = arith.constant 0 : i32
    return %c0_i32, %c0_i32_0 : i32, i32
  }
  func.func @transform_2(%arg0: i32) -> (i32, i32) {
    %c0_i32 = arith.constant 0 : i32
    %c0_i32_0 = arith.constant 0 : i32
    %c0_i32_1 = arith.constant 0 : i32
    return %c0_i32, %c0_i32_0 : i32, i32
  }
  func.func @transform_3(%arg0: i32) -> (i32, i32, i32) {
    %c0_i32 = arith.constant 0 : i32
    %c0_i32_0 = arith.constant 0 : i32
    %c0_i32_1 = arith.constant 0 : i32
    return %arg0, %c0_i32, %c0_i32_0 : i32, i32, i32
  }
  func.func @transform_4(%arg0: i32) -> (i32, i32, i32) {
    %c0_i32 = arith.constant 0 : i32
    %c0_i32_0 = arith.constant 0 : i32
    %c0_i32_1 = arith.constant 0 : i32
    return %arg0, %c0_i32, %c0_i32_0 : i32, i32, i32
  }
}

module attributes {stable_mosaic.version = 11 : i64} {
  func.func @affine_relu_conv_stats_kernel(%arg0: i32, %arg1: memref<1x4x128xf32, #tpu.memory_space<vmem>>, %arg2: memref<1x128xf32, #tpu.memory_space<vmem>>, %arg3: memref<1x128xf32, #tpu.memory_space<vmem>>, %arg4: memref<128x128xf32, #tpu.memory_space<vmem>>, %arg5: memref<64x128xf32, #tpu.memory_space<vmem>>, %arg6: memref<1x4x128xf32, #tpu.memory_space<vmem>>, %arg7: memref<1x2x128xf32, #tpu.memory_space<vmem>>, %arg8: memref<1x4x64xf32, #tpu.memory_space<vmem>>) attributes {dimension_semantics = [#tpu.dimension_semantics<parallel>], iteration_bounds = array<i64: 2>, scalar_prefetch = 0 : i64, scratch_operands = 1 : i64, tpu.core_type = #tpu.core_type<tc>, window_params = [{transform_indices = @transform_0, window_bounds = array<i64: 1, 4, 128>}, {pipeline_mode = #tpu.pipeline_mode<synchronous>, transform_indices = @transform_1, window_bounds = array<i64: 1, 128>}, {pipeline_mode = #tpu.pipeline_mode<synchronous>, transform_indices = @transform_2, window_bounds = array<i64: 1, 128>}, {pipeline_mode = #tpu.pipeline_mode<synchronous>, transform_indices = @transform_3, window_bounds = array<i64: 128, 128>}, {pipeline_mode = #tpu.pipeline_mode<synchronous>, transform_indices = @transform_4, window_bounds = array<i64: 64, 128>}, {transform_indices = @transform_5, window_bounds = array<i64: 1, 4, 128>}, {transform_indices = @transform_6, window_bounds = array<i64: 1, 2, 128>}]} {
    %c0 = arith.constant 0 : index
    %c0_0 = arith.constant 0 : index
    %c0_1 = arith.constant 0 : index
    %0 = vector.load %arg1[%c0, %c0_0, %c0_1] : memref<1x4x128xf32, #tpu.memory_space<vmem>>, vector<1x4x128xf32>
    %c0_2 = arith.constant 0 : index
    %c0_3 = arith.constant 0 : index
    %1 = vector.load %arg2[%c0_2, %c0_3] : memref<1x128xf32, #tpu.memory_space<vmem>>, vector<1x128xf32>
    %2 = vector.shape_cast %1 : vector<1x128xf32> to vector<1x1x128xf32>
    %3 = vector.broadcast %2 : vector<1x1x128xf32> to vector<1x4x128xf32>
    %4 = arith.mulf %0, %3 : vector<1x4x128xf32>
    %c0_4 = arith.constant 0 : index
    %c0_5 = arith.constant 0 : index
    %5 = vector.load %arg3[%c0_4, %c0_5] : memref<1x128xf32, #tpu.memory_space<vmem>>, vector<1x128xf32>
    %6 = vector.shape_cast %5 : vector<1x128xf32> to vector<1x1x128xf32>
    %7 = vector.broadcast %6 : vector<1x1x128xf32> to vector<1x4x128xf32>
    %8 = arith.addf %4, %7 : vector<1x4x128xf32>
    %cst = arith.constant 0.000000e+00 : f32
    %9 = vector.broadcast %cst : f32 to vector<1x4x128xf32>
    %10 = arith.maximumf %8, %9 : vector<1x4x128xf32>
    %cst_6 = arith.constant 0.000000e+00 : f32
    %11 = vector.broadcast %cst_6 : f32 to vector<1x1x32xf32>
    %c0_7 = arith.constant 0 : index
    %c0_8 = arith.constant 0 : index
    %c0_9 = arith.constant 0 : index
    %12 = vector.load %arg8[%c0_7, %c0_8, %c0_9] : memref<1x4x64xf32, #tpu.memory_space<vmem>>, vector<1x1x32xf32>
    tpu.vector_store %arg8[%c0_7, %c0_8, %c0_9], %11 {strides = array<i32>} : memref<1x4x64xf32, #tpu.memory_space<vmem>>, vector<1x1x32xf32>,
    %c0_10 = arith.constant 0 : index
    %c3 = arith.constant 3 : index
    %c32 = arith.constant 32 : index
    %13 = vector.load %arg8[%c0_10, %c3, %c32] : memref<1x4x64xf32, #tpu.memory_space<vmem>>, vector<1x1x32xf32>
    tpu.vector_store %arg8[%c0_10, %c3, %c32], %11 {strides = array<i32>} : memref<1x4x64xf32, #tpu.memory_space<vmem>>, vector<1x1x32xf32>,
    %14 = vector.extract_strided_slice %10 {offsets = [0, 0, 96], sizes = [1, 3, 32], strides = [1, 1, 1]} : vector<1x4x128xf32> to vector<1x3x32xf32>
    %c0_11 = arith.constant 0 : index
    %c1 = arith.constant 1 : index
    %c0_12 = arith.constant 0 : index
    %15 = vector.load %arg8[%c0_11, %c1, %c0_12] : memref<1x4x64xf32, #tpu.memory_space<vmem>>, vector<1x3x32xf32>
    tpu.vector_store %arg8[%c0_11, %c1, %c0_12], %14 {strides = array<i32>} : memref<1x4x64xf32, #tpu.memory_space<vmem>>, vector<1x3x32xf32>,
    %16 = vector.extract_strided_slice %10 {offsets = [0, 1, 0], sizes = [1, 3, 32], strides = [1, 1, 1]} : vector<1x4x128xf32> to vector<1x3x32xf32>
    %c0_13 = arith.constant 0 : index
    %c0_14 = arith.constant 0 : index
    %c32_15 = arith.constant 32 : index
    %17 = vector.load %arg8[%c0_13, %c0_14, %c32_15] : memref<1x4x64xf32, #tpu.memory_space<vmem>>, vector<1x3x32xf32>
    tpu.vector_store %arg8[%c0_13, %c0_14, %c32_15], %16 {strides = array<i32>} : memref<1x4x64xf32, #tpu.memory_space<vmem>>, vector<1x3x32xf32>,
    %18 = vector.shape_cast %10 : vector<1x4x128xf32> to vector<4x128xf32>
    %c0_16 = arith.constant 0 : index
    %c0_17 = arith.constant 0 : index
    %19 = vector.load %arg4[%c0_16, %c0_17] : memref<128x128xf32, #tpu.memory_space<vmem>>, vector<128x128xf32>
    %cst_18 = arith.constant dense<0.000000e+00> : vector<4x128xf32>
    %20 = tpu.matmul %18, %19, %cst_18 {dimension_numbers = #tpu.dot_dimension_numbers<[1], [0], [0], [1], [0, 0, 1, 1], [], []>} : vector<4x128xf32>, vector<128x128xf32>, vector<4x128xf32> -> vector<4x128xf32>
    %c0_19 = arith.constant 0 : index
    %c0_20 = arith.constant 0 : index
    %c0_21 = arith.constant 0 : index
    %21 = vector.load %arg8[%c0_19, %c0_20, %c0_21] : memref<1x4x64xf32, #tpu.memory_space<vmem>>, vector<1x4x64xf32>
    %22 = vector.shape_cast %21 : vector<1x4x64xf32> to vector<4x64xf32>
    %c0_22 = arith.constant 0 : index
    %c0_23 = arith.constant 0 : index
    %23 = vector.load %arg5[%c0_22, %c0_23] : memref<64x128xf32, #tpu.memory_space<vmem>>, vector<64x128xf32>
    %cst_24 = arith.constant dense<0.000000e+00> : vector<4x128xf32>
    %24 = tpu.matmul %22, %23, %cst_24 {dimension_numbers = #tpu.dot_dimension_numbers<[1], [0], [0], [1], [0, 0, 1, 1], [], []>} : vector<4x64xf32>, vector<64x128xf32>, vector<4x128xf32> -> vector<4x128xf32>
    %25 = arith.addf %20, %24 : vector<4x128xf32>
    %cst_25 = arith.constant dense<0.000000e+00> : vector<128xf32>
    %26 = vector.multi_reduction <add>, %25, %cst_25 [0] : vector<4x128xf32> to vector<128xf32>
    %27 = vector.shape_cast %26 : vector<128xf32> to vector<1x128xf32>
    %c0_26 = arith.constant 0 : index
    %c0_27 = arith.constant 0 : index
    %c0_28 = arith.constant 0 : index
    %28 = vector.load %arg7[%c0_26, %c0_27, %c0_28] : memref<1x2x128xf32, #tpu.memory_space<vmem>>, vector<1x1x128xf32>
    %29 = vector.shape_cast %28 : vector<1x1x128xf32> to vector<1x128xf32>
    %30 = vector.shape_cast %27 : vector<1x128xf32> to vector<1x1x128xf32>
    tpu.vector_store %arg7[%c0_26, %c0_27, %c0_28], %30 {strides = array<i32>} : memref<1x2x128xf32, #tpu.memory_space<vmem>>, vector<1x1x128xf32>,
    %31 = arith.mulf %25, %25 : vector<4x128xf32>
    %cst_29 = arith.constant dense<0.000000e+00> : vector<128xf32>
    %32 = vector.multi_reduction <add>, %31, %cst_29 [0] : vector<4x128xf32> to vector<128xf32>
    %33 = vector.shape_cast %32 : vector<128xf32> to vector<1x128xf32>
    %c0_30 = arith.constant 0 : index
    %c1_31 = arith.constant 1 : index
    %c0_32 = arith.constant 0 : index
    %34 = vector.load %arg7[%c0_30, %c1_31, %c0_32] : memref<1x2x128xf32, #tpu.memory_space<vmem>>, vector<1x1x128xf32>
    %35 = vector.shape_cast %34 : vector<1x1x128xf32> to vector<1x128xf32>
    %36 = vector.shape_cast %33 : vector<1x128xf32> to vector<1x1x128xf32>
    tpu.vector_store %arg7[%c0_30, %c1_31, %c0_32], %36 {strides = array<i32>} : memref<1x2x128xf32, #tpu.memory_space<vmem>>, vector<1x1x128xf32>,
    %37 = vector.shape_cast %25 : vector<4x128xf32> to vector<1x4x128xf32>
    %c0_33 = arith.constant 0 : index
    %c0_34 = arith.constant 0 : index
    %c0_35 = arith.constant 0 : index
    %38 = vector.load %arg6[%c0_33, %c0_34, %c0_35] : memref<1x4x128xf32, #tpu.memory_space<vmem>>, vector<1x4x128xf32>
    tpu.vector_store %arg6[%c0_33, %c0_34, %c0_35], %37 {strides = array<i32>} : memref<1x4x128xf32, #tpu.memory_space<vmem>>, vector<1x4x128xf32>,
    return
  }
  func.func @transform_0(%arg0: i32) -> (i32, i32, i32) {
    %c0_i32 = arith.constant 0 : i32
    %c0_i32_0 = arith.constant 0 : i32
    %c0_i32_1 = arith.constant 0 : i32
    return %arg0, %c0_i32, %c0_i32_0 : i32, i32, i32
  }
  func.func @transform_1(%arg0: i32) -> (i32, i32) {
    %c0_i32 = arith.constant 0 : i32
    %c0_i32_0 = arith.constant 0 : i32
    %c0_i32_1 = arith.constant 0 : i32
    return %c0_i32, %c0_i32_0 : i32, i32
  }
  func.func @transform_2(%arg0: i32) -> (i32, i32) {
    %c0_i32 = arith.constant 0 : i32
    %c0_i32_0 = arith.constant 0 : i32
    %c0_i32_1 = arith.constant 0 : i32
    return %c0_i32, %c0_i32_0 : i32, i32
  }
  func.func @transform_3(%arg0: i32) -> (i32, i32) {
    %c0_i32 = arith.constant 0 : i32
    %c0_i32_0 = arith.constant 0 : i32
    %c0_i32_1 = arith.constant 0 : i32
    return %c0_i32, %c0_i32_0 : i32, i32
  }
  func.func @transform_4(%arg0: i32) -> (i32, i32) {
    %c0_i32 = arith.constant 0 : i32
    %c0_i32_0 = arith.constant 0 : i32
    %c0_i32_1 = arith.constant 0 : i32
    return %c0_i32, %c0_i32_0 : i32, i32
  }
  func.func @transform_5(%arg0: i32) -> (i32, i32, i32) {
    %c0_i32 = arith.constant 0 : i32
    %c0_i32_0 = arith.constant 0 : i32
    %c0_i32_1 = arith.constant 0 : i32
    return %arg0, %c0_i32, %c0_i32_0 : i32, i32, i32
  }
  func.func @transform_6(%arg0: i32) -> (i32, i32, i32) {
    %c0_i32 = arith.constant 0 : i32
    %c0_i32_0 = arith.constant 0 : i32
    %c0_i32_1 = arith.constant 0 : i32
    return %arg0, %c0_i32, %c0_i32_0 : i32, i32, i32
  }
}

module attributes {stable_mosaic.version = 11 : i64} {
  func.func @bn_residual_relu_kernel(%arg0: i32, %arg1: memref<1x4x128xf32, #tpu.memory_space<vmem>>, %arg2: memref<1x4x128xf32, #tpu.memory_space<vmem>>, %arg3: memref<1x128xf32, #tpu.memory_space<vmem>>, %arg4: memref<1x128xf32, #tpu.memory_space<vmem>>, %arg5: memref<1x4x128xf32, #tpu.memory_space<vmem>>) attributes {dimension_semantics = [#tpu.dimension_semantics<parallel>], iteration_bounds = array<i64: 2>, scalar_prefetch = 0 : i64, scratch_operands = 0 : i64, tpu.core_type = #tpu.core_type<tc>, window_params = [{transform_indices = @transform_0, window_bounds = array<i64: 1, 4, 128>}, {transform_indices = @transform_1, window_bounds = array<i64: 1, 4, 128>}, {pipeline_mode = #tpu.pipeline_mode<synchronous>, transform_indices = @transform_2, window_bounds = array<i64: 1, 128>}, {pipeline_mode = #tpu.pipeline_mode<synchronous>, transform_indices = @transform_3, window_bounds = array<i64: 1, 128>}, {transform_indices = @transform_4, window_bounds = array<i64: 1, 4, 128>}]} {
    %c0 = arith.constant 0 : index
    %c0_0 = arith.constant 0 : index
    %c0_1 = arith.constant 0 : index
    %0 = vector.load %arg1[%c0, %c0_0, %c0_1] : memref<1x4x128xf32, #tpu.memory_space<vmem>>, vector<1x4x128xf32>
    %c0_2 = arith.constant 0 : index
    %c0_3 = arith.constant 0 : index
    %1 = vector.load %arg3[%c0_2, %c0_3] : memref<1x128xf32, #tpu.memory_space<vmem>>, vector<1x128xf32>
    %2 = vector.shape_cast %1 : vector<1x128xf32> to vector<1x1x128xf32>
    %3 = vector.broadcast %2 : vector<1x1x128xf32> to vector<1x4x128xf32>
    %4 = arith.mulf %0, %3 : vector<1x4x128xf32>
    %c0_4 = arith.constant 0 : index
    %c0_5 = arith.constant 0 : index
    %5 = vector.load %arg4[%c0_4, %c0_5] : memref<1x128xf32, #tpu.memory_space<vmem>>, vector<1x128xf32>
    %6 = vector.shape_cast %5 : vector<1x128xf32> to vector<1x1x128xf32>
    %7 = vector.broadcast %6 : vector<1x1x128xf32> to vector<1x4x128xf32>
    %8 = arith.addf %4, %7 : vector<1x4x128xf32>
    %c0_6 = arith.constant 0 : index
    %c0_7 = arith.constant 0 : index
    %c0_8 = arith.constant 0 : index
    %9 = vector.load %arg2[%c0_6, %c0_7, %c0_8] : memref<1x4x128xf32, #tpu.memory_space<vmem>>, vector<1x4x128xf32>
    %10 = arith.addf %8, %9 : vector<1x4x128xf32>
    %cst = arith.constant 0.000000e+00 : f32
    %11 = vector.broadcast %cst : f32 to vector<1x4x128xf32>
    %12 = arith.maximumf %10, %11 : vector<1x4x128xf32>
    %c0_9 = arith.constant 0 : index
    %c0_10 = arith.constant 0 : index
    %c0_11 = arith.constant 0 : index
    %13 = vector.load %arg5[%c0_9, %c0_10, %c0_11] : memref<1x4x128xf32, #tpu.memory_space<vmem>>, vector<1x4x128xf32>
    tpu.vector_store %arg5[%c0_9, %c0_10, %c0_11], %12 {strides = array<i32>} : memref<1x4x128xf32, #tpu.memory_space<vmem>>, vector<1x4x128xf32>,
    return
  }
  func.func @transform_0(%arg0: i32) -> (i32, i32, i32) {
    %c0_i32 = arith.constant 0 : i32
    %c0_i32_0 = arith.constant 0 : i32
    %c0_i32_1 = arith.constant 0 : i32
    return %arg0, %c0_i32, %c0_i32_0 : i32, i32, i32
  }
  func.func @transform_1(%arg0: i32) -> (i32, i32, i32) {
    %c0_i32 = arith.constant 0 : i32
    %c0_i32_0 = arith.constant 0 : i32
    %c0_i32_1 = arith.constant 0 : i32
    return %arg0, %c0_i32, %c0_i32_0 : i32, i32, i32
  }
  func.func @transform_2(%arg0: i32) -> (i32, i32) {
    %c0_i32 = arith.constant 0 : i32
    %c0_i32_0 = arith.constant 0 : i32
    %c0_i32_1 = arith.constant 0 : i32
    return %c0_i32, %c0_i32_0 : i32, i32
  }
  func.func @transform_3(%arg0: i32) -> (i32, i32) {
    %c0_i32 = arith.constant 0 : i32
    %c0_i32_0 = arith.constant 0 : i32
    %c0_i32_1 = arith.constant 0 : i32
    return %c0_i32, %c0_i32_0 : i32, i32
  }
  func.func @transform_4(%arg0: i32) -> (i32, i32, i32) {
    %c0_i32 = arith.constant 0 : i32
    %c0_i32_0 = arith.constant 0 : i32
    %c0_i32_1 = arith.constant 0 : i32
    return %arg0, %c0_i32, %c0_i32_0 : i32, i32, i32
  }
}

</mosaic_0001>

<llo_original>
// kernel: tile.23
$region0: #{tile.23}
  #allocation0 [shape = 's32[1]{0}', space=sflag, size = 0x4, scoped, tag = 'scoped memory for tile.23']
  %s0 = inlined_call_operand.vmem [shape: f32[32], index: 0, kind: input, shape index: {}]
  %s1 = inlined_call_operand.vmem [shape: f32[4,32], index: 1, kind: output, shape index: {}]
  // Predicated region
  $region2: #{tile.23} parent=0 // pred_check
    _
  $region3: #{tile.23} parent=0 // pred_check_branch
    %3 = sbr.rel (0) target = $region5
  $region4: #{tile.23} parent=0 // pred_region
    _
  $region5: #{tile.23} parent=0 // pred_fallthru
    _
  %v4 = vld [vmem:[%s0] ss:$0 sm:$0xff]
  %5 = vst [vmem:[%s1] sm:$0xf] %v4

// kernel: tile.24
$region0: #{tile.24}
  %s0 = inlined_call_operand.vmem [shape: f32[4,32], index: 0, kind: input, shape index: {}]
  %s1 = inlined_call_operand.vmem [shape: f32[1,128], index: 1, kind: output, shape index: {}]
  $region1: #{tile.24} parent=0
    #allocation0 [shape = 'u8[4096]{0}', space=vmem, size = 0x1000, scoped, tag = 'scoped mem for output reshape']
    #allocation1 [shape = 'u8[4096]{0}', space=vmem, size = 0x1000, scoped, tag = 'scoped mem for input reshape']
    %s3 = sshll.u32 1, 4
    %s4 = ssub.s32 %s3, 1
    %v5 = vld [vmem:[%s0] sm:%s4]
    %6 = vst [vmem:[#allocation1] sm:%s4] %v5
    %v7 = vld [vmem:[#allocation1] sm:$0x1]
    %vm8 = vcmask 261120
    %9 = vst.msk [vmem:[#allocation0] sm:$0x1] %vm8, %v7
    %s10 = scalar_lea.vmem [#allocation1], 3
    %v11 = vld [vmem:[%s10] sm:$0x1]
    %12 = vrot.lane.b32.xlu0 %v11, 96
    %v13 = vpop.permute.xlu0 %12
    %vm14 = vcmask 1048320
    %15 = vst.msk [vmem:[#allocation0] sm:$0x1] %vm14, %v13
    %s16 = scalar_lea.vmem [#allocation1], 2
    %v17 = vld [vmem:[%s16] sm:$0x1]
    %18 = vrot.lane.b32.xlu0 %v17, 64
    %v19 = vpop.permute.xlu0 %18
    %vm20 = vcmask 785920
    %21 = vst.msk [vmem:[#allocation0] sm:$0x1] %vm20, %v19
    %s22 = scalar_lea.vmem [#allocation1], 1
    %v23 = vld [vmem:[%s22] sm:$0x1]
    %24 = vrot.lane.b32.xlu0 %v23, 32
    %v25 = vpop.permute.xlu0 %24
    %vm26 = vcmask 523520
    %27 = vst.msk [vmem:[#allocation0] sm:$0x1] %vm26, %v25
    %s29 = sshll.u32 1, 1
    %s30 = ssub.s32 %s29, 1
    %v32 = vld [vmem:[#allocation0] sm:%s30]
    %s33 = sshll.u32 1, 1
    %s34 = ssub.s32 %s33, 1
    %35 = vst [vmem:[%s1] sm:%s34] %v32

// kernel: resblock_forward.3
$region0: #{resblock_forward.3}
  #allocation0 [shape = 'u32[]', space=smem, size = 0x4, offset = 0x4, fixed_abs, tag = 'smem constant byte address 0x4 - core index']
  #allocation1 [shape = 'u32[144,128]{1,0:T(1,128)}', space=vmem, size = 0x12000, scoped, tag = 'internal scratch']
  #allocation2 [shape = 'f32[1,4,64]{2,1,0:T(4,128)}', space=vmem, size = 0x800, scoped, tag = 'scratch operand']
  %s0 = inlined_call_operand.vmem [shape: f32[2,4,128], index: 0, kind: input, shape index: {}]
  %s1 = inlined_call_operand.vmem [shape: f32[128,128], index: 1, kind: input, shape index: {}]
  %s2 = inlined_call_operand.vmem [shape: f32[64,128], index: 2, kind: input, shape index: {}]
  %s3 = inlined_call_operand.vmem [shape: f32[2,4,128], index: 3, kind: output, shape index: {0}]
  %s4 = inlined_call_operand.vmem [shape: f32[2,2,128], index: 4, kind: output, shape index: {1}]
  %5 = xla_tuple %s3, %s4
  %s6 = sld [smem:[#allocation0]]
  $region53: #{resblock_forward.3} parent=0
    _
  %s8 = ssub.s32 1, %s6
  %s9 = scalar_select 0, %s8, %s6
  loop: start=0, step=1, limit=4
  $region2: #{resblock_forward.3} parent=0 // loop_pre_header
    _
  $region3: #{resblock_forward.3} parent=0 // loop_header
    %s11 = sphi 0, %s15
    %p12 = scmp.ge.s32.totalorder %s11, 4
    %s21 = sphi 0, %s23
    %s24 = sphi 0, %s21
    %s25 = sphi 0, %s24
    %s41 = sphi 0, %s25
    %s45 = sphi 0, %s45
    %s47 = sphi 0, %s45
    %s48 = sphi 0, %s47
    %s62 = sphi 0, %s48
    %s66 = sphi 0, %s66
    %s68 = sphi 0, %s66
    %s69 = sphi 0, %s68
    %s83 = sphi 0, %s69
    %s89 = sphi 0, %s91
    %s92 = sphi 0, %s89
    %s93 = sphi 0, %s92
    %s109 = sphi 0, %s93
    %s115 = sphi 0, %s117
    %s118 = sphi 0, %s115
    %s119 = sphi 0, %s118
    %s135 = sphi 0, %s119
  $region4: #{resblock_forward.3} parent=0 // loop_header_branch
    %14 = sbr.rel (%p12) target = $region8
  $region5: #{resblock_forward.3} parent=0 // loop_body
    %s16 = ssub.s32 %s11, 1
    %s17 = ssub.s32 %s11, 2
    %s18 = sadd.s32 %s11, 1
    %s19 = ssub.s32 %s11, %s18
    %p20 = scmp.eq.s32.totalorder %s19, 0
    %s22 = sadd.s32 %s21, 1
    %s23 = scalar_select %p20, %s21, %s22
    %p26 = pneg %p20
    %p27 = scmp.eq.s32.totalorder %s11, 1
    %p28 = por %p26, %p27
    %p29 = scmp.ne.s32.totalorder %s21, %s24
    %p30 = scmp.eq.s32.totalorder %s11, 0
    %p31 = por %p29, %p30
    %p32 = scmp.ne.s32.totalorder %s21, %s24
    %p33 = scmp.eq.s32.totalorder %s16, 1
    %p34 = por %p32, %p33
    %p35 = scmp.ne.s32.totalorder %s24, %s25
    %p36 = scmp.eq.s32.totalorder %s16, 0
    %p37 = por %p35, %p36
    %p38 = scmp.ne.s32.totalorder %s24, %s25
    %p39 = scmp.eq.s32.totalorder %s17, 1
    %p40 = por %p38, %p39
    %p42 = scmp.ne.s32.totalorder %s25, %s41
    %p43 = scmp.eq.s32.totalorder %s17, 0
    %p44 = por %p42, %p43
    %s46 = sadd.s32 %s45, 1
    %p49 = scmp.eq.s32.totalorder %s11, 1
    %p50 = scmp.ne.s32.totalorder %s45, %s47
    %p51 = scmp.eq.s32.totalorder %s11, 0
    %p52 = por %p50, %p51
    %p53 = scmp.ne.s32.totalorder %s45, %s47
    %p54 = scmp.eq.s32.totalorder %s16, 1
    %p55 = por %p53, %p54
    %p56 = scmp.ne.s32.totalorder %s47, %s48
    %p57 = scmp.eq.s32.totalorder %s16, 0
    %p58 = por %p56, %p57
    %p59 = scmp.ne.s32.totalorder %s47, %s48
    %p60 = scmp.eq.s32.totalorder %s17, 1
    %p61 = por %p59, %p60
    %p63 = scmp.ne.s32.totalorder %s48, %s62
    %p64 = scmp.eq.s32.totalorder %s17, 0
    %p65 = por %p63, %p64
    %s67 = sadd.s32 %s66, 1
    %p70 = scmp.eq.s32.totalorder %s11, 1
    %p71 = scmp.ne.s32.totalorder %s66, %s68
    %p72 = scmp.eq.s32.totalorder %s11, 0
    %p73 = por %p71, %p72
    %p74 = scmp.ne.s32.totalorder %s66, %s68
    %p75 = scmp.eq.s32.totalorder %s16, 1
    %p76 = por %p74, %p75
    %p77 = scmp.ne.s32.totalorder %s68, %s69
    %p78 = scmp.eq.s32.totalorder %s16, 0
    %p79 = por %p77, %p78
    %p80 = scmp.ne.s32.totalorder %s68, %s69
    %p81 = scmp.eq.s32.totalorder %s17, 1
    %p82 = por %p80, %p81
    %p84 = scmp.ne.s32.totalorder %s69, %s83
    %p85 = scmp.eq.s32.totalorder %s17, 0
    %p86 = por %p84, %p85
    %s87 = ssub.s32 %s11, %s18
    %p88 = scmp.eq.s32.totalorder %s87, 0
    %s90 = sadd.s32 %s89, 1
    %s91 = scalar_select %p88, %s89, %s90
    %p94 = pneg %p88
    %p95 = scmp.eq.s32.totalorder %s11, 1
    %p96 = por %p94, %p95
    %p97 = scmp.ne.s32.totalorder %s89, %s92
    %p98 = scmp.eq.s32.totalorder %s11, 0
    %p99 = por %p97, %p98
    %p100 = scmp.ne.s32.totalorder %s89, %s92
    %p101 = scmp.eq.s32.totalorder %s16, 1
    %p102 = por %p100, %p101
    %p103 = scmp.ne.s32.totalorder %s92, %s93
    %p104 = scmp.eq.s32.totalorder %s16, 0
    %p105 = por %p103, %p104
    %p106 = scmp.ne.s32.totalorder %s92, %s93
    %p107 = scmp.eq.s32.totalorder %s17, 1
    %p108 = por %p106, %p107
    %p110 = scmp.ne.s32.totalorder %s93, %s109
    %p111 = scmp.eq.s32.totalorder %s17, 0
    %p112 = por %p110, %p111
    %s113 = ssub.s32 %s11, %s18
    %p114 = scmp.eq.s32.totalorder %s113, 0
    %s116 = sadd.s32 %s115, 1
    %s117 = scalar_select %p114, %s115, %s116
    %p120 = pneg %p114
    %p121 = scmp.eq.s32.totalorder %s11, 1
    %p122 = por %p120, %p121
    %p123 = scmp.ne.s32.totalorder %s115, %s118
    %p124 = scmp.eq.s32.totalorder %s11, 0
    %p125 = por %p123, %p124
    %p126 = scmp.ne.s32.totalorder %s115, %s118
    %p127 = scmp.eq.s32.totalorder %s16, 1
    %p128 = por %p126, %p127
    %p129 = scmp.ne.s32.totalorder %s118, %s119
    %p130 = scmp.eq.s32.totalorder %s16, 0
    %p131 = por %p129, %p130
    %p132 = scmp.ne.s32.totalorder %s118, %s119
    %p133 = scmp.eq.s32.totalorder %s17, 1
    %p134 = por %p132, %p133
    %p136 = scmp.ne.s32.totalorder %s119, %s135
    %p137 = scmp.eq.s32.totalorder %s17, 0
    %p138 = por %p136, %p137
    %p139 = scmp.le.s32.totalorder 1, %s11
    %p140 = scmp.lt.s32.totalorder %s11, 3
    %p141 = pnand %p139, %p140
    %p142 = pneg %p141
    // Predicated region
    $region9: #{resblock_forward.3} parent=5 // pred_check
      _
    $region10: #{resblock_forward.3} parent=5 // pred_check_branch
      %144 = sbr.rel (%p141) target = $region12
    $region11: #{resblock_forward.3} parent=5 // pred_region
      %s145 = ssub.s32 %s11, 1
      // Predicated region
      $region13: #{resblock_forward.3} parent=11 // pred_check
        %p146 = pneg %p58
      $region14: #{resblock_forward.3} parent=11 // pred_check_branch
        %148 = sbr.rel (%p146) target = $region16
      $region15: #{resblock_forward.3} parent=11 // pred_region
        _
      $region16: #{resblock_forward.3} parent=11 // pred_fallthru
        _
      // Predicated region
      $region17: #{resblock_forward.3} parent=11 // pred_check
        %p149 = pneg %p79
      $region18: #{resblock_forward.3} parent=11 // pred_check_branch
        %151 = sbr.rel (%p149) target = $region20
      $region19: #{resblock_forward.3} parent=11 // pred_region
        _
      $region20: #{resblock_forward.3} parent=11 // pred_fallthru
        _
    $region12: #{resblock_forward.3} parent=5 // pred_fallthru
      _
    %p152 = scmp.lt.s32.totalorder %s11, 2
    // Predicated region
    $region21: #{resblock_forward.3} parent=5 // pred_check
      %p153 = pneg %p152
    $region22: #{resblock_forward.3} parent=5 // pred_check_branch
      %155 = sbr.rel (%p153) target = $region24
    $region23: #{resblock_forward.3} parent=5 // pred_region
      // Predicated region
      $region25: #{resblock_forward.3} parent=23 // pred_check
        %p156 = pneg %p31
      $region26: #{resblock_forward.3} parent=23 // pred_check_branch
        %158 = sbr.rel (%p156) target = $region28
      $region27: #{resblock_forward.3} parent=23 // pred_region
        %p159 = scmp.lt.s32.totalorder %s11, 1
        %s160 = scalar_select %p159, %s11, 1
        %s161 = smul.addr %s160, 4
        %s162 = scalar_lea.vmem %s0, %s161
      $region28: #{resblock_forward.3} parent=23 // pred_fallthru
        _
    $region24: #{resblock_forward.3} parent=5 // pred_fallthru
      _
    %p163 = scmp.le.s32.totalorder 1, %s11
    %p164 = scmp.lt.s32.totalorder %s11, 3
    %p165 = pnand %p163, %p164
    %p166 = pneg %p165
    // Predicated region
    $region29: #{resblock_forward.3} parent=5 // pred_check
      _
    $region30: #{resblock_forward.3} parent=5 // pred_check_branch
      %168 = sbr.rel (%p165) target = $region32
    $region31: #{resblock_forward.3} parent=5 // pred_region
      %s169 = ssub.s32 %s11, 1
      %p170 = scmp.lt.s32.totalorder %s16, 1
      %s171 = scalar_select %p170, %s16, 1
      %s172 = smul.addr %s171, 4
      %s173 = scalar_lea.vmem %s0, %s172
      %p174 = pneg %p37
      %p175 = pneg %p34
      %p176 = pneg %p58
      %p177 = pneg %p55
      %p178 = pneg %p79
      %p179 = pneg %p76
      %p180 = pneg %p105
      %p181 = pneg %p102
      %p182 = scmp.lt.s32.totalorder %s16, 1
      %s183 = scalar_select %p182, %s16, 1
      %s184 = smul.addr %s183, 4
      %s185 = scalar_lea.vmem %s3, %s184
      %p186 = pneg %p131
      %p187 = pneg %p128
      %p188 = scmp.lt.s32.totalorder %s16, 1
      %s189 = scalar_select %p188, %s16, 1
      %s190 = smul.addr %s189, 2
      %s191 = scalar_lea.vmem %s4, %s190
      %p192 = scmp.lt.s32.totalorder %s16, 1
      %s193 = scalar_select %p192, %s16, 1
      %s194 = smul.addr %s193, 4
      %s195 = scalar_lea.vmem %s0, %s194
      %p196 = scmp.lt.s32.totalorder %s16, 1
      %s197 = scalar_select %p196, %s16, 1
      %s198 = smul.addr %s197, 4
      %s199 = scalar_lea.vmem %s3, %s198
      %p200 = scmp.lt.s32.totalorder %s16, 1
      %s201 = scalar_select %p200, %s16, 1
      %s202 = smul.addr %s201, 2
      %s203 = scalar_lea.vmem %s4, %s202
      %v204 = vld [vmem:[%s195] sm:$0xf]
      %vm205 = vcmask 253952
      %206 = vst.msk [vmem:[#allocation2] sm:$0x1] %vm205, 0.0
      %vm207 = vcmask 516352
      %208 = vst.msk [vmem:[#allocation2 + $0x3] sm:$0x1] %vm207, 0.0
      %210 = vrot.lane.b32.xlu0 %v204, 32
      %v211 = vpop.permute.xlu0 %210
      %vm213 = vcmask 256000
      %214 = vst.msk [vmem:[#allocation2 + $0x1] sm:$0x7] %vm213, %v211
      %vm215 = vcmask 519425
      %216 = vst.msk [vmem:[#allocation2 - $0x1] sm:$0xe] %vm215, %v211
      %v217 = vld [vmem:[%s1] sm:$0xff]
      %v218 = vld [vmem:[%s1 + $0x8] sm:$0xff]
      %v219 = vld [vmem:[%s1 + $0x10] sm:$0xff]
      %v220 = vld [vmem:[%s1 + $0x18] sm:$0xff]
      %v221 = vld [vmem:[%s1 + $0x20] sm:$0xff]
      %v222 = vld [vmem:[%s1 + $0x28] sm:$0xff]
      %v223 = vld [vmem:[%s1 + $0x30] sm:$0xff]
      %v224 = vld [vmem:[%s1 + $0x38] sm:$0xff]
      %v225 = vld [vmem:[%s1 + $0x40] sm:$0xff]
      %v226 = vld [vmem:[%s1 + $0x48] sm:$0xff]
      %v227 = vld [vmem:[%s1 + $0x50] sm:$0xff]
      %v228 = vld [vmem:[%s1 + $0x58] sm:$0xff]
      %v229 = vld [vmem:[%s1 + $0x60] sm:$0xff]
      %v230 = vld [vmem:[%s1 + $0x68] sm:$0xff]
      %v231 = vld [vmem:[%s1 + $0x70] sm:$0xff]
      %v232 = vld [vmem:[%s1 + $0x78] sm:$0xff]
      %v233 = vld [vmem:[#allocation2] sm:$0xf]
      %v234 = vld [vmem:[%s2] sm:$0xff]
      %v235 = vld [vmem:[%s2 + $0x8] sm:$0xff]
      %v236 = vld [vmem:[%s2 + $0x10] sm:$0xff]
      %v237 = vld [vmem:[%s2 + $0x18] sm:$0xff]
      %v238 = vld [vmem:[%s2 + $0x20] sm:$0xff]
      %v239 = vld [vmem:[%s2 + $0x28] sm:$0xff]
      %v240 = vld [vmem:[%s2 + $0x30] sm:$0xff]
      %v241 = vld [vmem:[%s2 + $0x38] sm:$0xff]
      %vm242 = vcmask 523264
      %v244 = vsel %vm242, %v233, 0
      %246 = vmatprep.subr.mxu0 0.0
      %247 = vmatpush1.msra.mxu0 0.0
      %248 = vmatprep.subr.mxu0 0.0
      %249 = vmatpush1.msra.mxu0 0.0
      %250 = vmatprep.subr.mxu0 0.0
      %251 = vmatpush1.msra.mxu0 0.0
      %252 = vmatprep.subr.mxu0 0.0
      %253 = vmatpush1.msra.mxu0 0.0
      %254 = vmatprep.subr.mxu0 0.0
      %255 = vmatpush1.msra.mxu0 0.0
      %256 = vmatprep.subr.mxu0 0.0
      %257 = vmatpush1.msra.mxu0 0.0
      %258 = vmatprep.subr.mxu0 0.0
      %259 = vmatpush1.msra.mxu0 0.0
      %260 = vmatprep.subr.mxu0 0.0
      %261 = vmatpush1.msra.mxu0 0.0
      %262 = vmatprep.subr.mxu0 0.0
      %263 = vmatpush1.msra.mxu0 %v241
      %264 = vmatprep.subr.mxu0 0.0
      %265 = vmatpush1.msra.mxu0 %v240
      %266 = vmatprep.subr.mxu0 0.0
      %267 = vmatpush1.msra.mxu0 %v239
      %268 = vmatprep.subr.mxu0 0.0
      %269 = vmatpush1.msra.mxu0 %v238
      %270 = vmatprep.subr.mxu0 0.0
      %271 = vmatpush1.msra.mxu0 %v237
      %272 = vmatprep.subr.mxu0 0.0
      %273 = vmatpush1.msra.mxu0 %v236
      %274 = vmatprep.subr.mxu0 0.0
      %275 = vmatpush1.msra.mxu0 %v235
      %276 = vmatprep.subr.mxu0 0.0
      %277 = vmatpush1.msra.mxu0 %v234
      %278 = vmatprep.subr.mxu0 0.0
      %279 = vmatpush2.msra.mxu0 0.0
      %280 = vmatprep.subr.mxu0 0.0
      %281 = vmatpush2.msra.mxu0 0.0
      %282 = vmatprep.subr.mxu0 0.0
      %283 = vmatpush2.msra.mxu0 0.0
      %284 = vmatprep.subr.mxu0 0.0
      %285 = vmatpush2.msra.mxu0 0.0
      %286 = vmatprep.subr.mxu0 0.0
      %287 = vmatpush2.msra.mxu0 0.0
      %288 = vmatprep.subr.mxu0 0.0
      %289 = vmatpush2.msra.mxu0 0.0
      %290 = vmatprep.subr.mxu0 0.0
      %291 = vmatpush2.msra.mxu0 0.0
      %292 = vmatprep.subr.mxu0 0.0
      %293 = vmatpush2.msra.mxu0 0.0
      %294 = vmatprep.subr.mxu0 0.0
      %295 = vmatpush2.msra.mxu0 0.0
      %296 = vmatprep.subr.mxu0 0.0
      %297 = vmatpush2.msra.mxu0 0.0
      %298 = vmatprep.subr.mxu0 0.0
      %299 = vmatpush2.msra.mxu0 0.0
      %300 = vmatprep.subr.mxu0 0.0
      %301 = vmatpush2.msra.mxu0 0.0
      %302 = vmatprep.subr.mxu0 0.0
      %303 = vmatpush2.msra.mxu0 0.0
      %304 = vmatprep.subr.mxu0 0.0
      %305 = vmatpush2.msra.mxu0 0.0
      %306 = vmatprep.subr.mxu0 0.0
      %307 = vmatpush2.msra.mxu0 0.0
      %308 = vmatprep.subr.mxu0 0.0
      %309 = vmatpush2.msra.mxu0 0.0
      %310 = vmatprep.mubr.f32.mxu0 0.0
      %311 = vmatmul.mubr.f32.gmra.mxu0 %v244
      %v312 = vpop.f32.mrf.mxu0
      %v313 = vadd.f32 0.0, %v312
      %v314 = vpop.f32.mrf.mxu0
      %315 = vdwg.mxu0
      %316 = vmatprep.subr.mxu0 0.0
      %317 = vmatpush1.msra.mxu0 %v232
      %318 = vmatprep.subr.mxu0 0.0
      %319 = vmatpush1.msra.mxu0 %v231
      %320 = vmatprep.subr.mxu0 0.0
      %321 = vmatpush1.msra.mxu0 %v230
      %322 = vmatprep.subr.mxu0 0.0
      %323 = vmatpush1.msra.mxu0 %v229
      %324 = vmatprep.subr.mxu0 0.0
      %325 = vmatpush1.msra.mxu0 %v228
      %326 = vmatprep.subr.mxu0 0.0
      %327 = vmatpush1.msra.mxu0 %v227
      %328 = vmatprep.subr.mxu0 0.0
      %329 = vmatpush1.msra.mxu0 %v226
      %330 = vmatprep.subr.mxu0 0.0
      %331 = vmatpush1.msra.mxu0 %v225
      %332 = vmatprep.subr.mxu0 0.0
      %333 = vmatpush1.msra.mxu0 %v224
      %334 = vmatprep.subr.mxu0 0.0
      %335 = vmatpush1.msra.mxu0 %v223
      %336 = vmatprep.subr.mxu0 0.0
      %337 = vmatpush1.msra.mxu0 %v222
      %338 = vmatprep.subr.mxu0 0.0
      %339 = vmatpush1.msra.mxu0 %v221
      %340 = vmatprep.subr.mxu0 0.0
      %341 = vmatpush1.msra.mxu0 %v220
      %342 = vmatprep.subr.mxu0 0.0
      %343 = vmatpush1.msra.mxu0 %v219
      %344 = vmatprep.subr.mxu0 0.0
      %345 = vmatpush1.msra.mxu0 %v218
      %346 = vmatprep.subr.mxu0 0.0
      %347 = vmatpush1.msra.mxu0 %v217
      %348 = vmatprep.subr.mxu0 0.0
      %349 = vmatpush2.msra.mxu0 0.0
      %350 = vmatprep.subr.mxu0 0.0
      %351 = vmatpush2.msra.mxu0 0.0
      %352 = vmatprep.subr.mxu0 0.0
      %353 = vmatpush2.msra.mxu0 0.0
      %354 = vmatprep.subr.mxu0 0.0
      %355 = vmatpush2.msra.mxu0 0.0
      %356 = vmatprep.subr.mxu0 0.0
      %357 = vmatpush2.msra.mxu0 0.0
      %358 = vmatprep.subr.mxu0 0.0
      %359 = vmatpush2.msra.mxu0 0.0
      %360 = vmatprep.subr.mxu0 0.0
      %361 = vmatpush2.msra.mxu0 0.0
      %362 = vmatprep.subr.mxu0 0.0
      %363 = vmatpush2.msra.mxu0 0.0
      %364 = vmatprep.subr.mxu0 0.0
      %365 = vmatpush2.msra.mxu0 0.0
      %366 = vmatprep.subr.mxu0 0.0
      %367 = vmatpush2.msra.mxu0 0.0
      %368 = vmatprep.subr.mxu0 0.0
      %369 = vmatpush2.msra.mxu0 0.0
      %370 = vmatprep.subr.mxu0 0.0
      %371 = vmatpush2.msra.mxu0 0.0
      %372 = vmatprep.subr.mxu0 0.0
      %373 = vmatpush2.msra.mxu0 0.0
      %374 = vmatprep.subr.mxu0 0.0
      %375 = vmatpush2.msra.mxu0 0.0
      %376 = vmatprep.subr.mxu0 0.0
      %377 = vmatpush2.msra.mxu0 0.0
      %378 = vmatprep.subr.mxu0 0.0
      %379 = vmatpush2.msra.mxu0 0.0
      %380 = vmatprep.mubr.f32.mxu0 0.0
      %381 = vmatmul.mubr.f32.gmra.mxu0 %v204
      %v382 = vpop.f32.mrf.mxu0
      %v383 = vadd.f32 %v313, %v382
      %v384 = vpop.f32.mrf.mxu0
      %385 = vdwg.mxu0
      %vm386 = vcmask 1043456
      %v387 = vsel %vm386, %v383, 0.0
      %v388 = vrot.slane %v387, 4
      %v389 = vadd.f32 %v387, %v388
      %v390 = vrot.slane %v389, 2
      %v391 = vadd.f32 %v389, %v390
      %v392 = vrot.slane %v391, 1
      %v393 = vadd.f32 %v391, %v392
      %394 = vst [vmem:[%s203] sm:$0x1] %v393
      %v395 = vmul.f32 %v383, %v383
      %v396 = vsel %vm386, %v395, 0.0
      %v397 = vrot.slane %v396, 4
      %v398 = vadd.f32 %v396, %v397
      %v399 = vrot.slane %v398, 2
      %v400 = vadd.f32 %v398, %v399
      %v401 = vrot.slane %v400, 1
      %v402 = vadd.f32 %v400, %v401
      %403 = vst [vmem:[%s203 + $0x1] sm:$0x1] %v402
      %404 = vst [vmem:[%s199] sm:$0xf] %v383
      %p405 = scmp.lt.s32.totalorder %s16, 1
      %s406 = scalar_select %p405, %s16, 1
      %s407 = smul.addr %s406, 4
      %s408 = scalar_lea.vmem %s3, %s407
      %p409 = scmp.lt.s32.totalorder %s16, 1
      %s410 = scalar_select %p409, %s16, 1
      %s411 = smul.addr %s410, 2
      %s412 = scalar_lea.vmem %s4, %s411
      // Predicated region
      $region33: #{resblock_forward.3} parent=31 // pred_check
        %p413 = pneg %p102
      $region34: #{resblock_forward.3} parent=31 // pred_check_branch
        %415 = sbr.rel (%p413) target = $region36
      $region35: #{resblock_forward.3} parent=31 // pred_region
        _
      $region36: #{resblock_forward.3} parent=31 // pred_fallthru
        _
      // Predicated region
      $region37: #{resblock_forward.3} parent=31 // pred_check
        %p416 = pneg %p128
      $region38: #{resblock_forward.3} parent=31 // pred_check_branch
        %418 = sbr.rel (%p416) target = $region40
      $region39: #{resblock_forward.3} parent=31 // pred_region
        _
      $region40: #{resblock_forward.3} parent=31 // pred_fallthru
        _
    $region32: #{resblock_forward.3} parent=5 // pred_fallthru
      _
    %p419 = scmp.le.s32.totalorder 2, %s11
    // Predicated region
    $region41: #{resblock_forward.3} parent=5 // pred_check
      %p420 = pneg %p419
    $region42: #{resblock_forward.3} parent=5 // pred_check_branch
      %422 = sbr.rel (%p420) target = $region44
    $region43: #{resblock_forward.3} parent=5 // pred_region
      %s423 = ssub.s32 %s11, 2
      // Predicated region
      $region45: #{resblock_forward.3} parent=43 // pred_check
        %p424 = pneg %p108
      $region46: #{resblock_forward.3} parent=43 // pred_check_branch
        %426 = sbr.rel (%p424) target = $region48
      $region47: #{resblock_forward.3} parent=43 // pred_region
        %p427 = scmp.lt.s32.totalorder %s17, 1
        %s428 = scalar_select %p427, %s17, 1
        %s429 = smul.addr %s428, 4
        %s430 = scalar_lea.vmem %s3, %s429
      $region48: #{resblock_forward.3} parent=43 // pred_fallthru
        _
      // Predicated region
      $region49: #{resblock_forward.3} parent=43 // pred_check
        %p431 = pneg %p134
      $region50: #{resblock_forward.3} parent=43 // pred_check_branch
        %433 = sbr.rel (%p431) target = $region52
      $region51: #{resblock_forward.3} parent=43 // pred_region
        %p434 = scmp.lt.s32.totalorder %s17, 1
        %s435 = scalar_select %p434, %s17, 1
        %s436 = smul.addr %s435, 2
        %s437 = scalar_lea.vmem %s4, %s436
      $region52: #{resblock_forward.3} parent=43 // pred_fallthru
        _
    $region44: #{resblock_forward.3} parent=5 // pred_fallthru
      _
  $region6: #{resblock_forward.3} parent=0 // loop_footer
    %s15 = sadd.s32 1, %s11
  $region7: #{resblock_forward.3} parent=0 // loop_footer_branch
    %10 = sbr.rel target = $region3
  $region8: #{resblock_forward.3} parent=0 // loop_exit
    _

// kernel: resblock_forward.5
$region0: #{resblock_forward.5}
  #allocation0 [shape = 'u32[]', space=smem, size = 0x4, offset = 0x4, fixed_abs, tag = 'smem constant byte address 0x4 - core index']
  #allocation1 [shape = 'u32[144,128]{1,0:T(1,128)}', space=vmem, size = 0x12000, scoped, tag = 'internal scratch']
  %s0 = inlined_call_operand.vmem [shape: f32[2,4,128], index: 0, kind: input, shape index: {}]
  %s1 = inlined_call_operand.vmem [shape: f32[2,4,128], index: 1, kind: input, shape index: {}]
  %s2 = inlined_call_operand.vmem [shape: f32[1,128], index: 2, kind: input, shape index: {}]
  %s3 = inlined_call_operand.vmem [shape: f32[1,128], index: 3, kind: input, shape index: {}]
  %s4 = inlined_call_operand.vmem [shape: f32[2,4,128], index: 4, kind: output, shape index: {}]
  %s5 = sld [smem:[#allocation0]]
  $region49: #{resblock_forward.5} parent=0
    _
  %s7 = ssub.s32 1, %s5
  %s8 = scalar_select 0, %s7, %s5
  loop: start=0, step=1, limit=4
  $region2: #{resblock_forward.5} parent=0 // loop_pre_header
    _
  $region3: #{resblock_forward.5} parent=0 // loop_header
    %s10 = sphi 0, %s14
    %p11 = scmp.ge.s32.totalorder %s10, 4
    %s20 = sphi 0, %s22
    %s23 = sphi 0, %s20
    %s24 = sphi 0, %s23
    %s40 = sphi 0, %s24
    %s46 = sphi 0, %s48
    %s49 = sphi 0, %s46
    %s50 = sphi 0, %s49
    %s66 = sphi 0, %s50
    %s70 = sphi 0, %s70
    %s72 = sphi 0, %s70
    %s73 = sphi 0, %s72
    %s87 = sphi 0, %s73
    %s91 = sphi 0, %s91
    %s93 = sphi 0, %s91
    %s94 = sphi 0, %s93
    %s108 = sphi 0, %s94
    %s114 = sphi 0, %s116
    %s117 = sphi 0, %s114
    %s118 = sphi 0, %s117
    %s134 = sphi 0, %s118
  $region4: #{resblock_forward.5} parent=0 // loop_header_branch
    %13 = sbr.rel (%p11) target = $region8
  $region5: #{resblock_forward.5} parent=0 // loop_body
    %s15 = ssub.s32 %s10, 1
    %s16 = ssub.s32 %s10, 2
    %s17 = sadd.s32 %s10, 1
    %s18 = ssub.s32 %s10, %s17
    %p19 = scmp.eq.s32.totalorder %s18, 0
    %s21 = sadd.s32 %s20, 1
    %s22 = scalar_select %p19, %s20, %s21
    %p25 = pneg %p19
    %p26 = scmp.eq.s32.totalorder %s10, 1
    %p27 = por %p25, %p26
    %p28 = scmp.ne.s32.totalorder %s20, %s23
    %p29 = scmp.eq.s32.totalorder %s10, 0
    %p30 = por %p28, %p29
    %p31 = scmp.ne.s32.totalorder %s20, %s23
    %p32 = scmp.eq.s32.totalorder %s15, 1
    %p33 = por %p31, %p32
    %p34 = scmp.ne.s32.totalorder %s23, %s24
    %p35 = scmp.eq.s32.totalorder %s15, 0
    %p36 = por %p34, %p35
    %p37 = scmp.ne.s32.totalorder %s23, %s24
    %p38 = scmp.eq.s32.totalorder %s16, 1
    %p39 = por %p37, %p38
    %p41 = scmp.ne.s32.totalorder %s24, %s40
    %p42 = scmp.eq.s32.totalorder %s16, 0
    %p43 = por %p41, %p42
    %s44 = ssub.s32 %s10, %s17
    %p45 = scmp.eq.s32.totalorder %s44, 0
    %s47 = sadd.s32 %s46, 1
    %s48 = scalar_select %p45, %s46, %s47
    %p51 = pneg %p45
    %p52 = scmp.eq.s32.totalorder %s10, 1
    %p53 = por %p51, %p52
    %p54 = scmp.ne.s32.totalorder %s46, %s49
    %p55 = scmp.eq.s32.totalorder %s10, 0
    %p56 = por %p54, %p55
    %p57 = scmp.ne.s32.totalorder %s46, %s49
    %p58 = scmp.eq.s32.totalorder %s15, 1
    %p59 = por %p57, %p58
    %p60 = scmp.ne.s32.totalorder %s49, %s50
    %p61 = scmp.eq.s32.totalorder %s15, 0
    %p62 = por %p60, %p61
    %p63 = scmp.ne.s32.totalorder %s49, %s50
    %p64 = scmp.eq.s32.totalorder %s16, 1
    %p65 = por %p63, %p64
    %p67 = scmp.ne.s32.totalorder %s50, %s66
    %p68 = scmp.eq.s32.totalorder %s16, 0
    %p69 = por %p67, %p68
    %s71 = sadd.s32 %s70, 1
    %p74 = scmp.eq.s32.totalorder %s10, 1
    %p75 = scmp.ne.s32.totalorder %s70, %s72
    %p76 = scmp.eq.s32.totalorder %s10, 0
    %p77 = por %p75, %p76
    %p78 = scmp.ne.s32.totalorder %s70, %s72
    %p79 = scmp.eq.s32.totalorder %s15, 1
    %p80 = por %p78, %p79
    %p81 = scmp.ne.s32.totalorder %s72, %s73
    %p82 = scmp.eq.s32.totalorder %s15, 0
    %p83 = por %p81, %p82
    %p84 = scmp.ne.s32.totalorder %s72, %s73
    %p85 = scmp.eq.s32.totalorder %s16, 1
    %p86 = por %p84, %p85
    %p88 = scmp.ne.s32.totalorder %s73, %s87
    %p89 = scmp.eq.s32.totalorder %s16, 0
    %p90 = por %p88, %p89
    %s92 = sadd.s32 %s91, 1
    %p95 = scmp.eq.s32.totalorder %s10, 1
    %p96 = scmp.ne.s32.totalorder %s91, %s93
    %p97 = scmp.eq.s32.totalorder %s10, 0
    %p98 = por %p96, %p97
    %p99 = scmp.ne.s32.totalorder %s91, %s93
    %p100 = scmp.eq.s32.totalorder %s15, 1
    %p101 = por %p99, %p100
    %p102 = scmp.ne.s32.totalorder %s93, %s94
    %p103 = scmp.eq.s32.totalorder %s15, 0
    %p104 = por %p102, %p103
    %p105 = scmp.ne.s32.totalorder %s93, %s94
    %p106 = scmp.eq.s32.totalorder %s16, 1
    %p107 = por %p105, %p106
    %p109 = scmp.ne.s32.totalorder %s94, %s108
    %p110 = scmp.eq.s32.totalorder %s16, 0
    %p111 = por %p109, %p110
    %s112 = ssub.s32 %s10, %s17
    %p113 = scmp.eq.s32.totalorder %s112, 0
    %s115 = sadd.s32 %s114, 1
    %s116 = scalar_select %p113, %s114, %s115
    %p119 = pneg %p113
    %p120 = scmp.eq.s32.totalorder %s10, 1
    %p121 = por %p119, %p120
    %p122 = scmp.ne.s32.totalorder %s114, %s117
    %p123 = scmp.eq.s32.totalorder %s10, 0
    %p124 = por %p122, %p123
    %p125 = scmp.ne.s32.totalorder %s114, %s117
    %p126 = scmp.eq.s32.totalorder %s15, 1
    %p127 = por %p125, %p126
    %p128 = scmp.ne.s32.totalorder %s117, %s118
    %p129 = scmp.eq.s32.totalorder %s15, 0
    %p130 = por %p128, %p129
    %p131 = scmp.ne.s32.totalorder %s117, %s118
    %p132 = scmp.eq.s32.totalorder %s16, 1
    %p133 = por %p131, %p132
    %p135 = scmp.ne.s32.totalorder %s118, %s134
    %p136 = scmp.eq.s32.totalorder %s16, 0
    %p137 = por %p135, %p136
    %p138 = scmp.le.s32.totalorder 1, %s10
    %p139 = scmp.lt.s32.totalorder %s10, 3
    %p140 = pnand %p138, %p139
    %p141 = pneg %p140
    // Predicated region
    $region9: #{resblock_forward.5} parent=5 // pred_check
      _
    $region10: #{resblock_forward.5} parent=5 // pred_check_branch
      %143 = sbr.rel (%p140) target = $region12
    $region11: #{resblock_forward.5} parent=5 // pred_region
      %s144 = ssub.s32 %s10, 1
      // Predicated region
      $region13: #{resblock_forward.5} parent=11 // pred_check
        %p145 = pneg %p83
      $region14: #{resblock_forward.5} parent=11 // pred_check_branch
        %147 = sbr.rel (%p145) target = $region16
      $region15: #{resblock_forward.5} parent=11 // pred_region
        _
      $region16: #{resblock_forward.5} parent=11 // pred_fallthru
        _
      // Predicated region
      $region17: #{resblock_forward.5} parent=11 // pred_check
        %p148 = pneg %p104
      $region18: #{resblock_forward.5} parent=11 // pred_check_branch
        %150 = sbr.rel (%p148) target = $region20
      $region19: #{resblock_forward.5} parent=11 // pred_region
        _
      $region20: #{resblock_forward.5} parent=11 // pred_fallthru
        _
    $region12: #{resblock_forward.5} parent=5 // pred_fallthru
      _
    %p151 = scmp.lt.s32.totalorder %s10, 2
    // Predicated region
    $region21: #{resblock_forward.5} parent=5 // pred_check
      %p152 = pneg %p151
    $region22: #{resblock_forward.5} parent=5 // pred_check_branch
      %154 = sbr.rel (%p152) target = $region24
    $region23: #{resblock_forward.5} parent=5 // pred_region
      // Predicated region
      $region25: #{resblock_forward.5} parent=23 // pred_check
        %p155 = pneg %p30
      $region26: #{resblock_forward.5} parent=23 // pred_check_branch
        %157 = sbr.rel (%p155) target = $region28
      $region27: #{resblock_forward.5} parent=23 // pred_region
        %p158 = scmp.lt.s32.totalorder %s10, 1
        %s159 = scalar_select %p158, %s10, 1
        %s160 = smul.addr %s159, 4
        %s161 = scalar_lea.vmem %s0, %s160
      $region28: #{resblock_forward.5} parent=23 // pred_fallthru
        _
      // Predicated region
      $region29: #{resblock_forward.5} parent=23 // pred_check
        %p162 = pneg %p56
      $region30: #{resblock_forward.5} parent=23 // pred_check_branch
        %164 = sbr.rel (%p162) target = $region32
      $region31: #{resblock_forward.5} parent=23 // pred_region
        %p165 = scmp.lt.s32.totalorder %s10, 1
        %s166 = scalar_select %p165, %s10, 1
        %s167 = smul.addr %s166, 4
        %s168 = scalar_lea.vmem %s1, %s167
      $region32: #{resblock_forward.5} parent=23 // pred_fallthru
        _
    $region24: #{resblock_forward.5} parent=5 // pred_fallthru
      _
    %p169 = scmp.le.s32.totalorder 1, %s10
    %p170 = scmp.lt.s32.totalorder %s10, 3
    %p171 = pnand %p169, %p170
    %p172 = pneg %p171
    // Predicated region
    $region33: #{resblock_forward.5} parent=5 // pred_check
      _
    $region34: #{resblock_forward.5} parent=5 // pred_check_branch
      %174 = sbr.rel (%p171) target = $region36
    $region35: #{resblock_forward.5} parent=5 // pred_region
      %s175 = ssub.s32 %s10, 1
      %p176 = scmp.lt.s32.totalorder %s15, 1
      %s177 = scalar_select %p176, %s15, 1
      %s178 = smul.addr %s177, 4
      %s179 = scalar_lea.vmem %s0, %s178
      %p180 = pneg %p36
      %p181 = pneg %p33
      %p182 = scmp.lt.s32.totalorder %s15, 1
      %s183 = scalar_select %p182, %s15, 1
      %s184 = smul.addr %s183, 4
      %s185 = scalar_lea.vmem %s1, %s184
      %p186 = pneg %p62
      %p187 = pneg %p59
      %p188 = pneg %p83
      %p189 = pneg %p80
      %p190 = pneg %p104
      %p191 = pneg %p101
      %p192 = pneg %p130
      %p193 = pneg %p127
      %p194 = scmp.lt.s32.totalorder %s15, 1
      %s195 = scalar_select %p194, %s15, 1
      %s196 = smul.addr %s195, 4
      %s197 = scalar_lea.vmem %s4, %s196
      %p198 = scmp.lt.s32.totalorder %s15, 1
      %s199 = scalar_select %p198, %s15, 1
      %s200 = smul.addr %s199, 4
      %s201 = scalar_lea.vmem %s0, %s200
      %p202 = scmp.lt.s32.totalorder %s15, 1
      %s203 = scalar_select %p202, %s15, 1
      %s204 = smul.addr %s203, 4
      %s205 = scalar_lea.vmem %s1, %s204
      %p206 = scmp.lt.s32.totalorder %s15, 1
      %s207 = scalar_select %p206, %s15, 1
      %s208 = smul.addr %s207, 4
      %s209 = scalar_lea.vmem %s4, %s208
      %v210 = vld [vmem:[%s201] sm:$0xf]
      %v211 = vld [vmem:[%s2] sm:$0x1]
      %v213 = vlaneseq
      %v214 = vshrl.u32 %v213, 7
      %v215 = vsub.s32 0, %v214
      %v216 = vrot.slane %v211, %v215
      %v218 = vmul.f32 %v210, %v216
      %v219 = vld [vmem:[%s3] sm:$0x1]
      %v221 = vlaneseq
      %v222 = vshrl.u32 %v221, 7
      %v223 = vsub.s32 0, %v222
      %v224 = vrot.slane %v219, %v223
      %v226 = vadd.f32 %v218, %v224
      %v227 = vld [vmem:[%s205] sm:$0xf]
      %v228 = vadd.f32 %v226, %v227
      %v229 = vmax.f32 %v228, 0.0
      %230 = vst [vmem:[%s209] sm:$0xf] %v229
      %p231 = scmp.lt.s32.totalorder %s15, 1
      %s232 = scalar_select %p231, %s15, 1
      %s233 = smul.addr %s232, 4
      %s234 = scalar_lea.vmem %s4, %s233
      // Predicated region
      $region37: #{resblock_forward.5} parent=35 // pred_check
        %p235 = pneg %p127
      $region38: #{resblock_forward.5} parent=35 // pred_check_branch
        %237 = sbr.rel (%p235) target = $region40
      $region39: #{resblock_forward.5} parent=35 // pred_region
        _
      $region40: #{resblock_forward.5} parent=35 // pred_fallthru
        _
    $region36: #{resblock_forward.5} parent=5 // pred_fallthru
      _
    %p238 = scmp.le.s32.totalorder 2, %s10
    // Predicated region
    $region41: #{resblock_forward.5} parent=5 // pred_check
      %p239 = pneg %p238
    $region42: #{resblock_forward.5} parent=5 // pred_check_branch
      %241 = sbr.rel (%p239) target = $region44
    $region43: #{resblock_forward.5} parent=5 // pred_region
      %s242 = ssub.s32 %s10, 2
      // Predicated region
      $region45: #{resblock_forward.5} parent=43 // pred_check
        %p243 = pneg %p133
      $region46: #{resblock_forward.5} parent=43 // pred_check_branch
        %245 = sbr.rel (%p243) target = $region48
      $region47: #{resblock_forward.5} parent=43 // pred_region
        %p246 = scmp.lt.s32.totalorder %s16, 1
        %s247 = scalar_select %p246, %s16, 1
        %s248 = smul.addr %s247, 4
        %s249 = scalar_lea.vmem %s4, %s248
      $region48: #{resblock_forward.5} parent=43 // pred_fallthru
        _
    $region44: #{resblock_forward.5} parent=5 // pred_fallthru
      _
  $region6: #{resblock_forward.5} parent=0 // loop_footer
    %s14 = sadd.s32 1, %s10
  $region7: #{resblock_forward.5} parent=0 // loop_footer_branch
    %9 = sbr.rel target = $region3
  $region8: #{resblock_forward.5} parent=0 // loop_exit
    _

// kernel: resblock_forward.4
$region0: #{resblock_forward.4}
  #allocation0 [shape = 'u32[]', space=smem, size = 0x4, offset = 0x4, fixed_abs, tag = 'smem constant byte address 0x4 - core index']
  #allocation1 [shape = 'u32[144,128]{1,0:T(1,128)}', space=vmem, size = 0x12000, scoped, tag = 'internal scratch']
  #allocation2 [shape = 'f32[1,4,64]{2,1,0:T(4,128)}', space=vmem, size = 0x800, scoped, tag = 'scratch operand']
  %s0 = inlined_call_operand.vmem [shape: f32[2,4,128], index: 0, kind: input, shape index: {}]
  %s1 = inlined_call_operand.vmem [shape: f32[1,128], index: 1, kind: input, shape index: {}]
  %s2 = inlined_call_operand.vmem [shape: f32[1,128], index: 2, kind: input, shape index: {}]
  %s3 = inlined_call_operand.vmem [shape: f32[128,128], index: 3, kind: input, shape index: {}]
  %s4 = inlined_call_operand.vmem [shape: f32[64,128], index: 4, kind: input, shape index: {}]
  %s5 = inlined_call_operand.vmem [shape: f32[2,4,128], index: 5, kind: output, shape index: {0}]
  %s6 = inlined_call_operand.vmem [shape: f32[2,2,128], index: 6, kind: output, shape index: {1}]
  %7 = xla_tuple %s5, %s6
  %s8 = sld [smem:[#allocation0]]
  $region61: #{resblock_forward.4} parent=0
    _
  %s10 = ssub.s32 1, %s8
  %s11 = scalar_select 0, %s10, %s8
  loop: start=0, step=1, limit=4
  $region2: #{resblock_forward.4} parent=0 // loop_pre_header
    _
  $region3: #{resblock_forward.4} parent=0 // loop_header
    %s13 = sphi 0, %s17
    %p14 = scmp.ge.s32.totalorder %s13, 4
    %s23 = sphi 0, %s25
    %s26 = sphi 0, %s23
    %s27 = sphi 0, %s26
    %s43 = sphi 0, %s27
    %s47 = sphi 0, %s47
    %s49 = sphi 0, %s47
    %s50 = sphi 0, %s49
    %s64 = sphi 0, %s50
    %s68 = sphi 0, %s68
    %s70 = sphi 0, %s68
    %s71 = sphi 0, %s70
    %s85 = sphi 0, %s71
    %s89 = sphi 0, %s89
    %s91 = sphi 0, %s89
    %s92 = sphi 0, %s91
    %s106 = sphi 0, %s92
    %s110 = sphi 0, %s110
    %s112 = sphi 0, %s110
    %s113 = sphi 0, %s112
    %s127 = sphi 0, %s113
    %s133 = sphi 0, %s135
    %s136 = sphi 0, %s133
    %s137 = sphi 0, %s136
    %s153 = sphi 0, %s137
    %s159 = sphi 0, %s161
    %s162 = sphi 0, %s159
    %s163 = sphi 0, %s162
    %s179 = sphi 0, %s163
  $region4: #{resblock_forward.4} parent=0 // loop_header_branch
    %16 = sbr.rel (%p14) target = $region8
  $region5: #{resblock_forward.4} parent=0 // loop_body
    %s18 = ssub.s32 %s13, 1
    %s19 = ssub.s32 %s13, 2
    %s20 = sadd.s32 %s13, 1
    %s21 = ssub.s32 %s13, %s20
    %p22 = scmp.eq.s32.totalorder %s21, 0
    %s24 = sadd.s32 %s23, 1
    %s25 = scalar_select %p22, %s23, %s24
    %p28 = pneg %p22
    %p29 = scmp.eq.s32.totalorder %s13, 1
    %p30 = por %p28, %p29
    %p31 = scmp.ne.s32.totalorder %s23, %s26
    %p32 = scmp.eq.s32.totalorder %s13, 0
    %p33 = por %p31, %p32
    %p34 = scmp.ne.s32.totalorder %s23, %s26
    %p35 = scmp.eq.s32.totalorder %s18, 1
    %p36 = por %p34, %p35
    %p37 = scmp.ne.s32.totalorder %s26, %s27
    %p38 = scmp.eq.s32.totalorder %s18, 0
    %p39 = por %p37, %p38
    %p40 = scmp.ne.s32.totalorder %s26, %s27
    %p41 = scmp.eq.s32.totalorder %s19, 1
    %p42 = por %p40, %p41
    %p44 = scmp.ne.s32.totalorder %s27, %s43
    %p45 = scmp.eq.s32.totalorder %s19, 0
    %p46 = por %p44, %p45
    %s48 = sadd.s32 %s47, 1
    %p51 = scmp.eq.s32.totalorder %s13, 1
    %p52 = scmp.ne.s32.totalorder %s47, %s49
    %p53 = scmp.eq.s32.totalorder %s13, 0
    %p54 = por %p52, %p53
    %p55 = scmp.ne.s32.totalorder %s47, %s49
    %p56 = scmp.eq.s32.totalorder %s18, 1
    %p57 = por %p55, %p56
    %p58 = scmp.ne.s32.totalorder %s49, %s50
    %p59 = scmp.eq.s32.totalorder %s18, 0
    %p60 = por %p58, %p59
    %p61 = scmp.ne.s32.totalorder %s49, %s50
    %p62 = scmp.eq.s32.totalorder %s19, 1
    %p63 = por %p61, %p62
    %p65 = scmp.ne.s32.totalorder %s50, %s64
    %p66 = scmp.eq.s32.totalorder %s19, 0
    %p67 = por %p65, %p66
    %s69 = sadd.s32 %s68, 1
    %p72 = scmp.eq.s32.totalorder %s13, 1
    %p73 = scmp.ne.s32.totalorder %s68, %s70
    %p74 = scmp.eq.s32.totalorder %s13, 0
    %p75 = por %p73, %p74
    %p76 = scmp.ne.s32.totalorder %s68, %s70
    %p77 = scmp.eq.s32.totalorder %s18, 1
    %p78 = por %p76, %p77
    %p79 = scmp.ne.s32.totalorder %s70, %s71
    %p80 = scmp.eq.s32.totalorder %s18, 0
    %p81 = por %p79, %p80
    %p82 = scmp.ne.s32.totalorder %s70, %s71
    %p83 = scmp.eq.s32.totalorder %s19, 1
    %p84 = por %p82, %p83
    %p86 = scmp.ne.s32.totalorder %s71, %s85
    %p87 = scmp.eq.s32.totalorder %s19, 0
    %p88 = por %p86, %p87
    %s90 = sadd.s32 %s89, 1
    %p93 = scmp.eq.s32.totalorder %s13, 1
    %p94 = scmp.ne.s32.totalorder %s89, %s91
    %p95 = scmp.eq.s32.totalorder %s13, 0
    %p96 = por %p94, %p95
    %p97 = scmp.ne.s32.totalorder %s89, %s91
    %p98 = scmp.eq.s32.totalorder %s18, 1
    %p99 = por %p97, %p98
    %p100 = scmp.ne.s32.totalorder %s91, %s92
    %p101 = scmp.eq.s32.totalorder %s18, 0
    %p102 = por %p100, %p101
    %p103 = scmp.ne.s32.totalorder %s91, %s92
    %p104 = scmp.eq.s32.totalorder %s19, 1
    %p105 = por %p103, %p104
    %p107 = scmp.ne.s32.totalorder %s92, %s106
    %p108 = scmp.eq.s32.totalorder %s19, 0
    %p109 = por %p107, %p108
    %s111 = sadd.s32 %s110, 1
    %p114 = scmp.eq.s32.totalorder %s13, 1
    %p115 = scmp.ne.s32.totalorder %s110, %s112
    %p116 = scmp.eq.s32.totalorder %s13, 0
    %p117 = por %p115, %p116
    %p118 = scmp.ne.s32.totalorder %s110, %s112
    %p119 = scmp.eq.s32.totalorder %s18, 1
    %p120 = por %p118, %p119
    %p121 = scmp.ne.s32.totalorder %s112, %s113
    %p122 = scmp.eq.s32.totalorder %s18, 0
    %p123 = por %p121, %p122
    %p124 = scmp.ne.s32.totalorder %s112, %s113
    %p125 = scmp.eq.s32.totalorder %s19, 1
    %p126 = por %p124, %p125
    %p128 = scmp.ne.s32.totalorder %s113, %s127
    %p129 = scmp.eq.s32.totalorder %s19, 0
    %p130 = por %p128, %p129
    %s131 = ssub.s32 %s13, %s20
    %p132 = scmp.eq.s32.totalorder %s131, 0
    %s134 = sadd.s32 %s133, 1
    %s135 = scalar_select %p132, %s133, %s134
    %p138 = pneg %p132
    %p139 = scmp.eq.s32.totalorder %s13, 1
    %p140 = por %p138, %p139
    %p141 = scmp.ne.s32.totalorder %s133, %s136
    %p142 = scmp.eq.s32.totalorder %s13, 0
    %p143 = por %p141, %p142
    %p144 = scmp.ne.s32.totalorder %s133, %s136
    %p145 = scmp.eq.s32.totalorder %s18, 1
    %p146 = por %p144, %p145
    %p147 = scmp.ne.s32.totalorder %s136, %s137
    %p148 = scmp.eq.s32.totalorder %s18, 0
    %p149 = por %p147, %p148
    %p150 = scmp.ne.s32.totalorder %s136, %s137
    %p151 = scmp.eq.s32.totalorder %s19, 1
    %p152 = por %p150, %p151
    %p154 = scmp.ne.s32.totalorder %s137, %s153
    %p155 = scmp.eq.s32.totalorder %s19, 0
    %p156 = por %p154, %p155
    %s157 = ssub.s32 %s13, %s20
    %p158 = scmp.eq.s32.totalorder %s157, 0
    %s160 = sadd.s32 %s159, 1
    %s161 = scalar_select %p158, %s159, %s160
    %p164 = pneg %p158
    %p165 = scmp.eq.s32.totalorder %s13, 1
    %p166 = por %p164, %p165
    %p167 = scmp.ne.s32.totalorder %s159, %s162
    %p168 = scmp.eq.s32.totalorder %s13, 0
    %p169 = por %p167, %p168
    %p170 = scmp.ne.s32.totalorder %s159, %s162
    %p171 = scmp.eq.s32.totalorder %s18, 1
    %p172 = por %p170, %p171
    %p173 = scmp.ne.s32.totalorder %s162, %s163
    %p174 = scmp.eq.s32.totalorder %s18, 0
    %p175 = por %p173, %p174
    %p176 = scmp.ne.s32.totalorder %s162, %s163
    %p177 = scmp.eq.s32.totalorder %s19, 1
    %p178 = por %p176, %p177
    %p180 = scmp.ne.s32.totalorder %s163, %s179
    %p181 = scmp.eq.s32.totalorder %s19, 0
    %p182 = por %p180, %p181
    %p183 = scmp.le.s32.totalorder 1, %s13
    %p184 = scmp.lt.s32.totalorder %s13, 3
    %p185 = pnand %p183, %p184
    %p186 = pneg %p185
    // Predicated region
    $region9: #{resblock_forward.4} parent=5 // pred_check
      _
    $region10: #{resblock_forward.4} parent=5 // pred_check_branch
      %188 = sbr.rel (%p185) target = $region12
    $region11: #{resblock_forward.4} parent=5 // pred_region
      %s189 = ssub.s32 %s13, 1
      // Predicated region
      $region13: #{resblock_forward.4} parent=11 // pred_check
        %p190 = pneg %p60
      $region14: #{resblock_forward.4} parent=11 // pred_check_branch
        %192 = sbr.rel (%p190) target = $region16
      $region15: #{resblock_forward.4} parent=11 // pred_region
        _
      $region16: #{resblock_forward.4} parent=11 // pred_fallthru
        _
      // Predicated region
      $region17: #{resblock_forward.4} parent=11 // pred_check
        %p193 = pneg %p81
      $region18: #{resblock_forward.4} parent=11 // pred_check_branch
        %195 = sbr.rel (%p193) target = $region20
      $region19: #{resblock_forward.4} parent=11 // pred_region
        _
      $region20: #{resblock_forward.4} parent=11 // pred_fallthru
        _
      // Predicated region
      $region21: #{resblock_forward.4} parent=11 // pred_check
        %p196 = pneg %p102
      $region22: #{resblock_forward.4} parent=11 // pred_check_branch
        %198 = sbr.rel (%p196) target = $region24
      $region23: #{resblock_forward.4} parent=11 // pred_region
        _
      $region24: #{resblock_forward.4} parent=11 // pred_fallthru
        _
      // Predicated region
      $region25: #{resblock_forward.4} parent=11 // pred_check
        %p199 = pneg %p123
      $region26: #{resblock_forward.4} parent=11 // pred_check_branch
        %201 = sbr.rel (%p199) target = $region28
      $region27: #{resblock_forward.4} parent=11 // pred_region
        _
      $region28: #{resblock_forward.4} parent=11 // pred_fallthru
        _
    $region12: #{resblock_forward.4} parent=5 // pred_fallthru
      _
    %p202 = scmp.lt.s32.totalorder %s13, 2
    // Predicated region
    $region29: #{resblock_forward.4} parent=5 // pred_check
      %p203 = pneg %p202
    $region30: #{resblock_forward.4} parent=5 // pred_check_branch
      %205 = sbr.rel (%p203) target = $region32
    $region31: #{resblock_forward.4} parent=5 // pred_region
      // Predicated region
      $region33: #{resblock_forward.4} parent=31 // pred_check
        %p206 = pneg %p33
      $region34: #{resblock_forward.4} parent=31 // pred_check_branch
        %208 = sbr.rel (%p206) target = $region36
      $region35: #{resblock_forward.4} parent=31 // pred_region
        %p209 = scmp.lt.s32.totalorder %s13, 1
        %s210 = scalar_select %p209, %s13, 1
        %s211 = smul.addr %s210, 4
        %s212 = scalar_lea.vmem %s0, %s211
      $region36: #{resblock_forward.4} parent=31 // pred_fallthru
        _
    $region32: #{resblock_forward.4} parent=5 // pred_fallthru
      _
    %p213 = scmp.le.s32.totalorder 1, %s13
    %p214 = scmp.lt.s32.totalorder %s13, 3
    %p215 = pnand %p213, %p214
    %p216 = pneg %p215
    // Predicated region
    $region37: #{resblock_forward.4} parent=5 // pred_check
      _
    $region38: #{resblock_forward.4} parent=5 // pred_check_branch
      %218 = sbr.rel (%p215) target = $region40
    $region39: #{resblock_forward.4} parent=5 // pred_region
      %s219 = ssub.s32 %s13, 1
      %p220 = scmp.lt.s32.totalorder %s18, 1
      %s221 = scalar_select %p220, %s18, 1
      %s222 = smul.addr %s221, 4
      %s223 = scalar_lea.vmem %s0, %s222
      %p224 = pneg %p39
      %p225 = pneg %p36
      %p226 = pneg %p60
      %p227 = pneg %p57
      %p228 = pneg %p81
      %p229 = pneg %p78
      %p230 = pneg %p102
      %p231 = pneg %p99
      %p232 = pneg %p123
      %p233 = pneg %p120
      %p234 = pneg %p149
      %p235 = pneg %p146
      %p236 = scmp.lt.s32.totalorder %s18, 1
      %s237 = scalar_select %p236, %s18, 1
      %s238 = smul.addr %s237, 4
      %s239 = scalar_lea.vmem %s5, %s238
      %p240 = pneg %p175
      %p241 = pneg %p172
      %p242 = scmp.lt.s32.totalorder %s18, 1
      %s243 = scalar_select %p242, %s18, 1
      %s244 = smul.addr %s243, 2
      %s245 = scalar_lea.vmem %s6, %s244
      %p246 = scmp.lt.s32.totalorder %s18, 1
      %s247 = scalar_select %p246, %s18, 1
      %s248 = smul.addr %s247, 4
      %s249 = scalar_lea.vmem %s0, %s248
      %p250 = scmp.lt.s32.totalorder %s18, 1
      %s251 = scalar_select %p250, %s18, 1
      %s252 = smul.addr %s251, 4
      %s253 = scalar_lea.vmem %s5, %s252
      %p254 = scmp.lt.s32.totalorder %s18, 1
      %s255 = scalar_select %p254, %s18, 1
      %s256 = smul.addr %s255, 2
      %s257 = scalar_lea.vmem %s6, %s256
      %v258 = vld [vmem:[%s249] sm:$0xf]
      %v259 = vld [vmem:[%s1] sm:$0x1]
      %v261 = vlaneseq
      %v262 = vshrl.u32 %v261, 7
      %v263 = vsub.s32 0, %v262
      %v264 = vrot.slane %v259, %v263
      %v266 = vmul.f32 %v258, %v264
      %v267 = vld [vmem:[%s2] sm:$0x1]
      %v269 = vlaneseq
      %v270 = vshrl.u32 %v269, 7
      %v271 = vsub.s32 0, %v270
      %v272 = vrot.slane %v267, %v271
      %v274 = vadd.f32 %v266, %v272
      %v275 = vmax.f32 %v274, 0.0
      %vm276 = vcmask 253952
      %277 = vst.msk [vmem:[#allocation2] sm:$0x1] %vm276, 0.0
      %vm278 = vcmask 516352
      %279 = vst.msk [vmem:[#allocation2 + $0x3] sm:$0x1] %vm278, 0.0
      %281 = vrot.lane.b32.xlu0 %v275, 32
      %v282 = vpop.permute.xlu0 %281
      %vm284 = vcmask 256000
      %285 = vst.msk [vmem:[#allocation2 + $0x1] sm:$0x7] %vm284, %v282
      %vm286 = vcmask 519425
      %287 = vst.msk [vmem:[#allocation2 - $0x1] sm:$0xe] %vm286, %v282
      %v288 = vld [vmem:[%s3] sm:$0xff]
      %v289 = vld [vmem:[%s3 + $0x8] sm:$0xff]
      %v290 = vld [vmem:[%s3 + $0x10] sm:$0xff]
      %v291 = vld [vmem:[%s3 + $0x18] sm:$0xff]
      %v292 = vld [vmem:[%s3 + $0x20] sm:$0xff]
      %v293 = vld [vmem:[%s3 + $0x28] sm:$0xff]
      %v294 = vld [vmem:[%s3 + $0x30] sm:$0xff]
      %v295 = vld [vmem:[%s3 + $0x38] sm:$0xff]
      %v296 = vld [vmem:[%s3 + $0x40] sm:$0xff]
      %v297 = vld [vmem:[%s3 + $0x48] sm:$0xff]
      %v298 = vld [vmem:[%s3 + $0x50] sm:$0xff]
      %v299 = vld [vmem:[%s3 + $0x58] sm:$0xff]
      %v300 = vld [vmem:[%s3 + $0x60] sm:$0xff]
      %v301 = vld [vmem:[%s3 + $0x68] sm:$0xff]
      %v302 = vld [vmem:[%s3 + $0x70] sm:$0xff]
      %v303 = vld [vmem:[%s3 + $0x78] sm:$0xff]
      %v304 = vld [vmem:[#allocation2] sm:$0xf]
      %v305 = vld [vmem:[%s4] sm:$0xff]
      %v306 = vld [vmem:[%s4 + $0x8] sm:$0xff]
      %v307 = vld [vmem:[%s4 + $0x10] sm:$0xff]
      %v308 = vld [vmem:[%s4 + $0x18] sm:$0xff]
      %v309 = vld [vmem:[%s4 + $0x20] sm:$0xff]
      %v310 = vld [vmem:[%s4 + $0x28] sm:$0xff]
      %v311 = vld [vmem:[%s4 + $0x30] sm:$0xff]
      %v312 = vld [vmem:[%s4 + $0x38] sm:$0xff]
      %vm313 = vcmask 523264
      %v315 = vsel %vm313, %v304, 0
      %317 = vmatprep.subr.mxu0 0.0
      %318 = vmatpush1.msra.mxu0 0.0
      %319 = vmatprep.subr.mxu0 0.0
      %320 = vmatpush1.msra.mxu0 0.0
      %321 = vmatprep.subr.mxu0 0.0
      %322 = vmatpush1.msra.mxu0 0.0
      %323 = vmatprep.subr.mxu0 0.0
      %324 = vmatpush1.msra.mxu0 0.0
      %325 = vmatprep.subr.mxu0 0.0
      %326 = vmatpush1.msra.mxu0 0.0
      %327 = vmatprep.subr.mxu0 0.0
      %328 = vmatpush1.msra.mxu0 0.0
      %329 = vmatprep.subr.mxu0 0.0
      %330 = vmatpush1.msra.mxu0 0.0
      %331 = vmatprep.subr.mxu0 0.0
      %332 = vmatpush1.msra.mxu0 0.0
      %333 = vmatprep.subr.mxu0 0.0
      %334 = vmatpush1.msra.mxu0 %v312
      %335 = vmatprep.subr.mxu0 0.0
      %336 = vmatpush1.msra.mxu0 %v311
      %337 = vmatprep.subr.mxu0 0.0
      %338 = vmatpush1.msra.mxu0 %v310
      %339 = vmatprep.subr.mxu0 0.0
      %340 = vmatpush1.msra.mxu0 %v309
      %341 = vmatprep.subr.mxu0 0.0
      %342 = vmatpush1.msra.mxu0 %v308
      %343 = vmatprep.subr.mxu0 0.0
      %344 = vmatpush1.msra.mxu0 %v307
      %345 = vmatprep.subr.mxu0 0.0
      %346 = vmatpush1.msra.mxu0 %v306
      %347 = vmatprep.subr.mxu0 0.0
      %348 = vmatpush1.msra.mxu0 %v305
      %349 = vmatprep.subr.mxu0 0.0
      %350 = vmatpush2.msra.mxu0 0.0
      %351 = vmatprep.subr.mxu0 0.0
      %352 = vmatpush2.msra.mxu0 0.0
      %353 = vmatprep.subr.mxu0 0.0
      %354 = vmatpush2.msra.mxu0 0.0
      %355 = vmatprep.subr.mxu0 0.0
      %356 = vmatpush2.msra.mxu0 0.0
      %357 = vmatprep.subr.mxu0 0.0
      %358 = vmatpush2.msra.mxu0 0.0
      %359 = vmatprep.subr.mxu0 0.0
      %360 = vmatpush2.msra.mxu0 0.0
      %361 = vmatprep.subr.mxu0 0.0
      %362 = vmatpush2.msra.mxu0 0.0
      %363 = vmatprep.subr.mxu0 0.0
      %364 = vmatpush2.msra.mxu0 0.0
      %365 = vmatprep.subr.mxu0 0.0
      %366 = vmatpush2.msra.mxu0 0.0
      %367 = vmatprep.subr.mxu0 0.0
      %368 = vmatpush2.msra.mxu0 0.0
      %369 = vmatprep.subr.mxu0 0.0
      %370 = vmatpush2.msra.mxu0 0.0
      %371 = vmatprep.subr.mxu0 0.0
      %372 = vmatpush2.msra.mxu0 0.0
      %373 = vmatprep.subr.mxu0 0.0
      %374 = vmatpush2.msra.mxu0 0.0
      %375 = vmatprep.subr.mxu0 0.0
      %376 = vmatpush2.msra.mxu0 0.0
      %377 = vmatprep.subr.mxu0 0.0
      %378 = vmatpush2.msra.mxu0 0.0
      %379 = vmatprep.subr.mxu0 0.0
      %380 = vmatpush2.msra.mxu0 0.0
      %381 = vmatprep.mubr.f32.mxu0 0.0
      %382 = vmatmul.mubr.f32.gmra.mxu0 %v315
      %v383 = vpop.f32.mrf.mxu0
      %v384 = vadd.f32 0.0, %v383
      %v385 = vpop.f32.mrf.mxu0
      %386 = vdwg.mxu0
      %387 = vmatprep.subr.mxu0 0.0
      %388 = vmatpush1.msra.mxu0 %v303
      %389 = vmatprep.subr.mxu0 0.0
      %390 = vmatpush1.msra.mxu0 %v302
      %391 = vmatprep.subr.mxu0 0.0
      %392 = vmatpush1.msra.mxu0 %v301
      %393 = vmatprep.subr.mxu0 0.0
      %394 = vmatpush1.msra.mxu0 %v300
      %395 = vmatprep.subr.mxu0 0.0
      %396 = vmatpush1.msra.mxu0 %v299
      %397 = vmatprep.subr.mxu0 0.0
      %398 = vmatpush1.msra.mxu0 %v298
      %399 = vmatprep.subr.mxu0 0.0
      %400 = vmatpush1.msra.mxu0 %v297
      %401 = vmatprep.subr.mxu0 0.0
      %402 = vmatpush1.msra.mxu0 %v296
      %403 = vmatprep.subr.mxu0 0.0
      %404 = vmatpush1.msra.mxu0 %v295
      %405 = vmatprep.subr.mxu0 0.0
      %406 = vmatpush1.msra.mxu0 %v294
      %407 = vmatprep.subr.mxu0 0.0
      %408 = vmatpush1.msra.mxu0 %v293
      %409 = vmatprep.subr.mxu0 0.0
      %410 = vmatpush1.msra.mxu0 %v292
      %411 = vmatprep.subr.mxu0 0.0
      %412 = vmatpush1.msra.mxu0 %v291
      %413 = vmatprep.subr.mxu0 0.0
      %414 = vmatpush1.msra.mxu0 %v290
      %415 = vmatprep.subr.mxu0 0.0
      %416 = vmatpush1.msra.mxu0 %v289
      %417 = vmatprep.subr.mxu0 0.0
      %418 = vmatpush1.msra.mxu0 %v288
      %419 = vmatprep.subr.mxu0 0.0
      %420 = vmatpush2.msra.mxu0 0.0
      %421 = vmatprep.subr.mxu0 0.0
      %422 = vmatpush2.msra.mxu0 0.0
      %423 = vmatprep.subr.mxu0 0.0
      %424 = vmatpush2.msra.mxu0 0.0
      %425 = vmatprep.subr.mxu0 0.0
      %426 = vmatpush2.msra.mxu0 0.0
      %427 = vmatprep.subr.mxu0 0.0
      %428 = vmatpush2.msra.mxu0 0.0
      %429 = vmatprep.subr.mxu0 0.0
      %430 = vmatpush2.msra.mxu0 0.0
      %431 = vmatprep.subr.mxu0 0.0
      %432 = vmatpush2.msra.mxu0 0.0
      %433 = vmatprep.subr.mxu0 0.0
      %434 = vmatpush2.msra.mxu0 0.0
      %435 = vmatprep.subr.mxu0 0.0
      %436 = vmatpush2.msra.mxu0 0.0
      %437 = vmatprep.subr.mxu0 0.0
      %438 = vmatpush2.msra.mxu0 0.0
      %439 = vmatprep.subr.mxu0 0.0
      %440 = vmatpush2.msra.mxu0 0.0
      %441 = vmatprep.subr.mxu0 0.0
      %442 = vmatpush2.msra.mxu0 0.0
      %443 = vmatprep.subr.mxu0 0.0
      %444 = vmatpush2.msra.mxu0 0.0
      %445 = vmatprep.subr.mxu0 0.0
      %446 = vmatpush2.msra.mxu0 0.0
      %447 = vmatprep.subr.mxu0 0.0
      %448 = vmatpush2.msra.mxu0 0.0
      %449 = vmatprep.subr.mxu0 0.0
      %450 = vmatpush2.msra.mxu0 0.0
      %451 = vmatprep.mubr.f32.mxu0 0.0
      %452 = vmatmul.mubr.f32.gmra.mxu0 %v275
      %v453 = vpop.f32.mrf.mxu0
      %v454 = vadd.f32 %v384, %v453
      %v455 = vpop.f32.mrf.mxu0
      %456 = vdwg.mxu0
      %vm457 = vcmask 1043456
      %v458 = vsel %vm457, %v454, 0.0
      %v459 = vrot.slane %v458, 4
      %v460 = vadd.f32 %v458, %v459
      %v461 = vrot.slane %v460, 2
      %v462 = vadd.f32 %v460, %v461
      %v463 = vrot.slane %v462, 1
      %v464 = vadd.f32 %v462, %v463
      %465 = vst [vmem:[%s257] sm:$0x1] %v464
      %v466 = vmul.f32 %v454, %v454
      %v467 = vsel %vm457, %v466, 0.0
      %v468 = vrot.slane %v467, 4
      %v469 = vadd.f32 %v467, %v468
      %v470 = vrot.slane %v469, 2
      %v471 = vadd.f32 %v469, %v470
      %v472 = vrot.slane %v471, 1
      %v473 = vadd.f32 %v471, %v472
      %474 = vst [vmem:[%s257 + $0x1] sm:$0x1] %v473
      %475 = vst [vmem:[%s253] sm:$0xf] %v454
      %p476 = scmp.lt.s32.totalorder %s18, 1
      %s477 = scalar_select %p476, %s18, 1
      %s478 = smul.addr %s477, 4
      %s479 = scalar_lea.vmem %s5, %s478
      %p480 = scmp.lt.s32.totalorder %s18, 1
      %s481 = scalar_select %p480, %s18, 1
      %s482 = smul.addr %s481, 2
      %s483 = scalar_lea.vmem %s6, %s482
      // Predicated region
      $region41: #{resblock_forward.4} parent=39 // pred_check
        %p484 = pneg %p146
      $region42: #{resblock_forward.4} parent=39 // pred_check_branch
        %486 = sbr.rel (%p484) target = $region44
      $region43: #{resblock_forward.4} parent=39 // pred_region
        _
      $region44: #{resblock_forward.4} parent=39 // pred_fallthru
        _
      // Predicated region
      $region45: #{resblock_forward.4} parent=39 // pred_check
        %p487 = pneg %p172
      $region46: #{resblock_forward.4} parent=39 // pred_check_branch
        %489 = sbr.rel (%p487) target = $region48
      $region47: #{resblock_forward.4} parent=39 // pred_region
        _
      $region48: #{resblock_forward.4} parent=39 // pred_fallthru
        _
    $region40: #{resblock_forward.4} parent=5 // pred_fallthru
      _
    %p490 = scmp.le.s32.totalorder 2, %s13
    // Predicated region
    $region49: #{resblock_forward.4} parent=5 // pred_check
      %p491 = pneg %p490
    $region50: #{resblock_forward.4} parent=5 // pred_check_branch
      %493 = sbr.rel (%p491) target = $region52
    $region51: #{resblock_forward.4} parent=5 // pred_region
      %s494 = ssub.s32 %s13, 2
      // Predicated region
      $region53: #{resblock_forward.4} parent=51 // pred_check
        %p495 = pneg %p152
      $region54: #{resblock_forward.4} parent=51 // pred_check_branch
        %497 = sbr.rel (%p495) target = $region56
      $region55: #{resblock_forward.4} parent=51 // pred_region
        %p498 = scmp.lt.s32.totalorder %s19, 1
        %s499 = scalar_select %p498, %s19, 1
        %s500 = smul.addr %s499, 4
        %s501 = scalar_lea.vmem %s5, %s500
      $region56: #{resblock_forward.4} parent=51 // pred_fallthru
        _
      // Predicated region
      $region57: #{resblock_forward.4} parent=51 // pred_check
        %p502 = pneg %p178
      $region58: #{resblock_forward.4} parent=51 // pred_check_branch
        %504 = sbr.rel (%p502) target = $region60
      $region59: #{resblock_forward.4} parent=51 // pred_region
        %p505 = scmp.lt.s32.totalorder %s19, 1
        %s506 = scalar_select %p505, %s19, 1
        %s507 = smul.addr %s506, 2
        %s508 = scalar_lea.vmem %s6, %s507
      $region60: #{resblock_forward.4} parent=51 // pred_fallthru
        _
    $region52: #{resblock_forward.4} parent=5 // pred_fallthru
      _
  $region6: #{resblock_forward.4} parent=0 // loop_footer
    %s17 = sadd.s32 1, %s13
  $region7: #{resblock_forward.4} parent=0 // loop_footer_branch
    %12 = sbr.rel target = $region3
  $region8: #{resblock_forward.4} parent=0 // loop_exit
    _

</llo_original>
